<compile_context>
chip_gen: v7x
topology: tpu7x:2x2x1
jax: 0.10.0
libtpu: 0.0.40
codegen_flags: <defaults>
</compile_context>

<pallas_src>
import jax
import jax.numpy as jnp
from jax.experimental import pallas as pl
from jax.experimental.pallas import tpu as pltpu


# ------------------------------ fused kernel ---------------------------------
def _make_fused_kernel(T, B, D, H, n_layer, n_out):
    def kernel(*refs):
        i = 0
        x_ref = refs[i]; i += 1                          # (T*B, D) time-major, flattened
        layers = []
        for _ in range(n_layer):                         # per layer: (Din,4H), (H,4H), (1,4H)
            layers.append((refs[i], refs[i + 1], refs[i + 2]))
            i += 3
        wd1_ref, bd1_ref, wd2_ref, bd2_ref = refs[i:i + 4]; i += 4
        dec_ref, enc_ref = refs[i], refs[i + 1]          # outputs: (B,n_out), (B,H)

        # ---- fused-gate LSTM cell helpers (z is the full (B,4H) pre-activation) ----
        def cell_first(z):
            # t == 0: h_prev = c_prev = 0  =>  f-gate and f*c term are dead.
            s = jax.nn.sigmoid(z)                        # 1 full-vreg EUP push
            th = jnp.tanh(z)                             # 1 full-vreg EUP push
            i_g = s[:, 0:H]
            g_g = th[:, 2 * H:3 * H]
            o_g = s[:, 3 * H:4 * H]
            c = i_g * g_g
            h = o_g * jnp.tanh(c)
            return h, c

        def cell(z, c_prev):
            s = jax.nn.sigmoid(z)
            th = jnp.tanh(z)
            i_g = s[:, 0:H]
            f_g = s[:, H:2 * H]
            g_g = th[:, 2 * H:3 * H]
            o_g = s[:, 3 * H:4 * H]
            c = f_g * c_prev + i_g * g_g
            h = o_g * jnp.tanh(c)
            return h, c

        # Load all weights from VMEM once (outside the unrolled recurrence).
        w_ih = [layers[li][0][...] for li in range(n_layer)]   # (Din,4H) / (H,4H)
        w_hh = [layers[li][1][...] for li in range(n_layer)]   # (H,4H)
        bias = [layers[li][2][...] for li in range(n_layer)]   # (1,4H)

        # Layer-0 input projection hoisted off the serial path:
        # one (T*B, D) x (D, 4H) matmul, fused [i|f|g|o] lane layout.
        gx0 = (jnp.dot(x_ref[...], w_ih[0], preferred_element_type=jnp.float32)
               + bias[0])                                      # (T*B, 4H)

        h = [None] * n_layer
        c = [None] * n_layer

        # Wavefront over (t, layer): fully unrolled (T and n_layer are small & static).
        for t in range(T):
            gx_t = gx0[t * B:(t + 1) * B, :]                   # (B, 4H) static slice
            if t == 0:
                h[0], c[0] = cell_first(gx_t)
            else:
                z = gx_t + jnp.dot(h[0], w_hh[0],
                                   preferred_element_type=jnp.float32)
                h[0], c[0] = cell(z, c[0])

            for li in range(1, n_layer):
                zin = (jnp.dot(h[li - 1], w_ih[li],
                               preferred_element_type=jnp.float32) + bias[li])
                if t == 0:
                    h[li], c[li] = cell_first(zin)
                else:
                    z = zin + jnp.dot(h[li], w_hh[li],
                                      preferred_element_type=jnp.float32)
                    h[li], c[li] = cell(z, c[li])

        # encode = hidden state of the last layer at the last timestep
        h_last = h[n_layer - 1]
        enc_ref[...] = h_last

        # decoder: Linear -> (Dropout = identity in eval) -> Tanh -> Linear
        z = jnp.tanh(
            jnp.dot(h_last, wd1_ref[...], preferred_element_type=jnp.float32)
            + bd1_ref[...])
        dec_ref[...] = (
            jnp.dot(z, wd2_ref[...], preferred_element_type=jnp.float32)
            + bd2_ref[...])

    return kernel


# ------------------------------- full forward --------------------------------
def autoencoder_lstm_forward(x_btd, params):
    """x_btd: (B, T, in_dim). Returns (decode (B, n_out), encode (B, H))."""
    B, T, D = x_btd.shape
    H = params["lstm"][0][1].shape[0]           # w_hh_all: (H, 4H)
    n_layer = len(params["lstm"])
    n_out = params["w2_t"].shape[-1]

    # time-major, flattened to (T*B, D): row t*B + b is sample b at timestep t
    x_2d = jnp.transpose(x_btd, (1, 0, 2)).reshape(T * B, D)

    inputs = [x_2d]
    for (w_ih, w_hh, b) in params["lstm"]:
        inputs += [w_ih, w_hh, b]
    inputs += [params["w1_t"], params["b1"], params["w2_t"], params["b2"]]

    vmem = pl.BlockSpec(memory_space=pltpu.MemorySpace.VMEM)
    dec, enc = pl.pallas_call(
        _make_fused_kernel(T, B, D, H, n_layer, n_out),
        out_shape=(
            jax.ShapeDtypeStruct((B, n_out), jnp.float32),
            jax.ShapeDtypeStruct((B, H), jnp.float32),
        ),
        in_specs=[vmem] * len(inputs),
        out_specs=(vmem, vmem),
    )(*inputs)
    return dec, enc


# ------------------------------ param construction ---------------------------
def init_params(key, in_dim, hidden_dim, n_layer, n_out):
    keys = jax.random.split(key, 4 * n_layer + 4)
    k = iter(range(len(keys)))
    bound = 1.0 / jnp.sqrt(hidden_dim)
    H = hidden_dim

    lstm_params = []
    layer_in = in_dim
    for _ in range(n_layer):
        # PyTorch layout: (4H, Din) / (4H, H) stacked in [i|f|g|o] row order.
        w_ih = jax.random.uniform(keys[next(k)], (4 * H, layer_in),
                                  minval=-bound, maxval=bound, dtype=jnp.float32)
        w_hh = jax.random.uniform(keys[next(k)], (4 * H, H),
                                  minval=-bound, maxval=bound, dtype=jnp.float32)
        b_ih = jax.random.uniform(keys[next(k)], (4 * H,),
                                  minval=-bound, maxval=bound, dtype=jnp.float32)
        b_hh = jax.random.uniform(keys[next(k)], (4 * H,),
                                  minval=-bound, maxval=bound, dtype=jnp.float32)
        # Fused, pre-transposed layout: (Din, 4H), (H, 4H), (1, 4H) with
        # lane blocks [0:H]=i, [H:2H]=f, [2H:3H]=g, [3H:4H]=o.
        w_ih_all = w_ih.T
        w_hh_all = w_hh.T
        b_all = (b_ih + b_hh)[None, :]
        lstm_params.append((w_ih_all, w_hh_all, b_all))
        layer_in = H

    w1 = jax.random.uniform(keys[next(k)], (H, H),
                            minval=-bound, maxval=bound, dtype=jnp.float32)
    b1 = jax.random.uniform(keys[next(k)], (H,),
                            minval=-bound, maxval=bound, dtype=jnp.float32)
    w2 = jax.random.uniform(keys[next(k)], (n_out, H),
                            minval=-bound, maxval=bound, dtype=jnp.float32)
    b2 = jax.random.uniform(keys[next(k)], (n_out,),
                            minval=-bound, maxval=bound, dtype=jnp.float32)

    return {
        "lstm": lstm_params,
        "w1_t": w1.T, "b1": b1[None, :],
        "w2_t": w2.T, "b2": b2[None, :],
    }


# ----------------------------- pure-JAX reference -----------------------------
def _reference_forward(x_btd, params):
    """Faithful layer-by-layer LSTM (PyTorch equations) on the fused weight layout."""
    B = x_btd.shape[0]
    h_seq = jnp.transpose(x_btd, (1, 0, 2))     # (T, B, D)
    for (w_ih, w_hh, b) in params["lstm"]:
        H = w_hh.shape[0]

        def step(carry, x_t, w_ih=w_ih, w_hh=w_hh, b=b, H=H):
            h, c = carry
            z = x_t @ w_ih + h @ w_hh + b        # (B, 4H), [i|f|g|o]
            i = jax.nn.sigmoid(z[:, 0:H])
            f = jax.nn.sigmoid(z[:, H:2 * H])
            g = jnp.tanh(z[:, 2 * H:3 * H])
            o = jax.nn.sigmoid(z[:, 3 * H:4 * H])
            c = f * c + i * g
            h = o * jnp.tanh(c)
            return (h, c), h

        init = (jnp.zeros((B, H), jnp.float32), jnp.zeros((B, H), jnp.float32))
        _, h_seq = jax.lax.scan(step, init, h_seq)
    encode = h_seq[-1]
    z = jnp.tanh(encode @ params["w1_t"] + params["b1"])
    decode = z @ params["w2_t"] + params["b2"]
    return decode, encode


if __name__ == "__main__":
    B, T, IN_DIM, HIDDEN, N_LAYER, N_OUT = 2, 8, 16, 32, 2, 8

    key = jax.random.PRNGKey(0)
    kx, kp = jax.random.split(key)
    x = jax.random.normal(kx, (B, T, IN_DIM), dtype=jnp.float32)
    params = init_params(kp, IN_DIM, HIDDEN, N_LAYER, N_OUT)

    decode, encode = autoencoder_lstm_forward(x, params)
    decode = jax.block_until_ready(decode)
    encode = jax.block_until_ready(encode)

    ref_decode, ref_encode = _reference_forward(x, params)
    assert decode.shape == (B, N_OUT) and encode.shape == (B, HIDDEN)
    assert jnp.allclose(decode, ref_decode, atol=1e-4, rtol=1e-4)
    assert jnp.allclose(encode, ref_encode, atol=1e-4, rtol=1e-4)

    print("KERNEL_OK")
</pallas_src>

<mosaic_0001>
module attributes {stable_mosaic.version = 11 : i64} {
  func.func @kernel(%arg0: memref<16x16xf32, #tpu.memory_space<vmem>>, %arg1: memref<16x128xf32, #tpu.memory_space<vmem>>, %arg2: memref<32x128xf32, #tpu.memory_space<vmem>>, %arg3: memref<1x128xf32, #tpu.memory_space<vmem>>, %arg4: memref<32x128xf32, #tpu.memory_space<vmem>>, %arg5: memref<32x128xf32, #tpu.memory_space<vmem>>, %arg6: memref<1x128xf32, #tpu.memory_space<vmem>>, %arg7: memref<32x32xf32, #tpu.memory_space<vmem>>, %arg8: memref<1x32xf32, #tpu.memory_space<vmem>>, %arg9: memref<32x8xf32, #tpu.memory_space<vmem>>, %arg10: memref<1x8xf32, #tpu.memory_space<vmem>>, %arg11: memref<2x8xf32, #tpu.memory_space<vmem>>, %arg12: memref<2x32xf32, #tpu.memory_space<vmem>>) attributes {dimension_semantics = [], scalar_prefetch = 0 : i64, scratch_operands = 0 : i64, tpu.core_type = #tpu.core_type<tc>} {
    %c0 = arith.constant 0 : index
    %c0_0 = arith.constant 0 : index
    %0 = vector.load %arg1[%c0, %c0_0] : memref<16x128xf32, #tpu.memory_space<vmem>>, vector<16x128xf32>
    %c0_1 = arith.constant 0 : index
    %c0_2 = arith.constant 0 : index
    %1 = vector.load %arg4[%c0_1, %c0_2] : memref<32x128xf32, #tpu.memory_space<vmem>>, vector<32x128xf32>
    %c0_3 = arith.constant 0 : index
    %c0_4 = arith.constant 0 : index
    %2 = vector.load %arg2[%c0_3, %c0_4] : memref<32x128xf32, #tpu.memory_space<vmem>>, vector<32x128xf32>
    %c0_5 = arith.constant 0 : index
    %c0_6 = arith.constant 0 : index
    %3 = vector.load %arg5[%c0_5, %c0_6] : memref<32x128xf32, #tpu.memory_space<vmem>>, vector<32x128xf32>
    %c0_7 = arith.constant 0 : index
    %c0_8 = arith.constant 0 : index
    %4 = vector.load %arg3[%c0_7, %c0_8] : memref<1x128xf32, #tpu.memory_space<vmem>>, vector<1x128xf32>
    %c0_9 = arith.constant 0 : index
    %c0_10 = arith.constant 0 : index
    %5 = vector.load %arg6[%c0_9, %c0_10] : memref<1x128xf32, #tpu.memory_space<vmem>>, vector<1x128xf32>
    %c0_11 = arith.constant 0 : index
    %c0_12 = arith.constant 0 : index
    %6 = vector.load %arg0[%c0_11, %c0_12] : memref<16x16xf32, #tpu.memory_space<vmem>>, vector<16x16xf32>
    %cst = arith.constant dense<0.000000e+00> : vector<16x128xf32>
    %7 = tpu.matmul %6, %0, %cst {dimension_numbers = #tpu.dot_dimension_numbers<[1], [0], [0], [1], [0, 0, 1, 1], [], []>} : vector<16x16xf32>, vector<16x128xf32>, vector<16x128xf32> -> vector<16x128xf32>
    %8 = vector.broadcast %4 : vector<1x128xf32> to vector<16x128xf32>
    %9 = arith.addf %7, %8 : vector<16x128xf32>
    %10 = vector.extract_strided_slice %9 {offsets = [0, 0], sizes = [2, 128], strides = [1, 1]} : vector<16x128xf32> to vector<2x128xf32>
    %11 = arith.negf %10 : vector<2x128xf32>
    %12 = math.exp %11 : vector<2x128xf32>
    %cst_13 = arith.constant 1.000000e+00 : f32
    %13 = vector.broadcast %cst_13 : f32 to vector<2x128xf32>
    %14 = arith.addf %13, %12 : vector<2x128xf32>
    %15 = arith.divf %13, %14 : vector<2x128xf32>
    %16 = math.tanh %10 : vector<2x128xf32>
    %17 = vector.extract_strided_slice %15 {offsets = [0, 0], sizes = [2, 32], strides = [1, 1]} : vector<2x128xf32> to vector<2x32xf32>
    %18 = vector.extract_strided_slice %16 {offsets = [0, 64], sizes = [2, 32], strides = [1, 1]} : vector<2x128xf32> to vector<2x32xf32>
    %19 = vector.extract_strided_slice %15 {offsets = [0, 96], sizes = [2, 32], strides = [1, 1]} : vector<2x128xf32> to vector<2x32xf32>
    %20 = arith.mulf %17, %18 : vector<2x32xf32>
    %21 = math.tanh %20 : vector<2x32xf32>
    %22 = arith.mulf %19, %21 : vector<2x32xf32>
    %cst_14 = arith.constant dense<0.000000e+00> : vector<2x128xf32>
    %23 = tpu.matmul %22, %1, %cst_14 {dimension_numbers = #tpu.dot_dimension_numbers<[1], [0], [0], [1], [0, 0, 1, 1], [], []>} : vector<2x32xf32>, vector<32x128xf32>, vector<2x128xf32> -> vector<2x128xf32>
    %24 = vector.broadcast %5 : vector<1x128xf32> to vector<2x128xf32>
    %25 = arith.addf %23, %24 : vector<2x128xf32>
    %26 = arith.negf %25 : vector<2x128xf32>
    %27 = math.exp %26 : vector<2x128xf32>
    %cst_15 = arith.constant 1.000000e+00 : f32
    %28 = vector.broadcast %cst_15 : f32 to vector<2x128xf32>
    %29 = arith.addf %28, %27 : vector<2x128xf32>
    %30 = arith.divf %28, %29 : vector<2x128xf32>
    %31 = math.tanh %25 : vector<2x128xf32>
    %32 = vector.extract_strided_slice %30 {offsets = [0, 0], sizes = [2, 32], strides = [1, 1]} : vector<2x128xf32> to vector<2x32xf32>
    %33 = vector.extract_strided_slice %31 {offsets = [0, 64], sizes = [2, 32], strides = [1, 1]} : vector<2x128xf32> to vector<2x32xf32>
    %34 = vector.extract_strided_slice %30 {offsets = [0, 96], sizes = [2, 32], strides = [1, 1]} : vector<2x128xf32> to vector<2x32xf32>
    %35 = arith.mulf %32, %33 : vector<2x32xf32>
    %36 = math.tanh %35 : vector<2x32xf32>
    %37 = arith.mulf %34, %36 : vector<2x32xf32>
    %38 = vector.extract_strided_slice %9 {offsets = [2, 0], sizes = [2, 128], strides = [1, 1]} : vector<16x128xf32> to vector<2x128xf32>
    %cst_16 = arith.constant dense<0.000000e+00> : vector<2x128xf32>
    %39 = tpu.matmul %22, %2, %cst_16 {dimension_numbers = #tpu.dot_dimension_numbers<[1], [0], [0], [1], [0, 0, 1, 1], [], []>} : vector<2x32xf32>, vector<32x128xf32>, vector<2x128xf32> -> vector<2x128xf32>
    %40 = arith.addf %38, %39 : vector<2x128xf32>
    %41 = arith.negf %40 : vector<2x128xf32>
    %42 = math.exp %41 : vector<2x128xf32>
    %cst_17 = arith.constant 1.000000e+00 : f32
    %43 = vector.broadcast %cst_17 : f32 to vector<2x128xf32>
    %44 = arith.addf %43, %42 : vector<2x128xf32>
    %45 = arith.divf %43, %44 : vector<2x128xf32>
    %46 = math.tanh %40 : vector<2x128xf32>
    %47 = vector.extract_strided_slice %45 {offsets = [0, 0], sizes = [2, 32], strides = [1, 1]} : vector<2x128xf32> to vector<2x32xf32>
    %48 = vector.extract_strided_slice %45 {offsets = [0, 32], sizes = [2, 32], strides = [1, 1]} : vector<2x128xf32> to vector<2x32xf32>
    %49 = vector.extract_strided_slice %46 {offsets = [0, 64], sizes = [2, 32], strides = [1, 1]} : vector<2x128xf32> to vector<2x32xf32>
    %50 = vector.extract_strided_slice %45 {offsets = [0, 96], sizes = [2, 32], strides = [1, 1]} : vector<2x128xf32> to vector<2x32xf32>
    %51 = arith.mulf %48, %20 : vector<2x32xf32>
    %52 = arith.mulf %47, %49 : vector<2x32xf32>
    %53 = arith.addf %51, %52 : vector<2x32xf32>
    %54 = math.tanh %53 : vector<2x32xf32>
    %55 = arith.mulf %50, %54 : vector<2x32xf32>
    %cst_18 = arith.constant dense<0.000000e+00> : vector<2x128xf32>
    %56 = tpu.matmul %55, %1, %cst_18 {dimension_numbers = #tpu.dot_dimension_numbers<[1], [0], [0], [1], [0, 0, 1, 1], [], []>} : vector<2x32xf32>, vector<32x128xf32>, vector<2x128xf32> -> vector<2x128xf32>
    %57 = vector.broadcast %5 : vector<1x128xf32> to vector<2x128xf32>
    %58 = arith.addf %56, %57 : vector<2x128xf32>
    %cst_19 = arith.constant dense<0.000000e+00> : vector<2x128xf32>
    %59 = tpu.matmul %37, %3, %cst_19 {dimension_numbers = #tpu.dot_dimension_numbers<[1], [0], [0], [1], [0, 0, 1, 1], [], []>} : vector<2x32xf32>, vector<32x128xf32>, vector<2x128xf32> -> vector<2x128xf32>
    %60 = arith.addf %58, %59 : vector<2x128xf32>
    %61 = arith.negf %60 : vector<2x128xf32>
    %62 = math.exp %61 : vector<2x128xf32>
    %cst_20 = arith.constant 1.000000e+00 : f32
    %63 = vector.broadcast %cst_20 : f32 to vector<2x128xf32>
    %64 = arith.addf %63, %62 : vector<2x128xf32>
    %65 = arith.divf %63, %64 : vector<2x128xf32>
    %66 = math.tanh %60 : vector<2x128xf32>
    %67 = vector.extract_strided_slice %65 {offsets = [0, 0], sizes = [2, 32], strides = [1, 1]} : vector<2x128xf32> to vector<2x32xf32>
    %68 = vector.extract_strided_slice %65 {offsets = [0, 32], sizes = [2, 32], strides = [1, 1]} : vector<2x128xf32> to vector<2x32xf32>
    %69 = vector.extract_strided_slice %66 {offsets = [0, 64], sizes = [2, 32], strides = [1, 1]} : vector<2x128xf32> to vector<2x32xf32>
    %70 = vector.extract_strided_slice %65 {offsets = [0, 96], sizes = [2, 32], strides = [1, 1]} : vector<2x128xf32> to vector<2x32xf32>
    %71 = arith.mulf %68, %35 : vector<2x32xf32>
    %72 = arith.mulf %67, %69 : vector<2x32xf32>
    %73 = arith.addf %71, %72 : vector<2x32xf32>
    %74 = math.tanh %73 : vector<2x32xf32>
    %75 = arith.mulf %70, %74 : vector<2x32xf32>
    %76 = vector.extract_strided_slice %9 {offsets = [4, 0], sizes = [2, 128], strides = [1, 1]} : vector<16x128xf32> to vector<2x128xf32>
    %cst_21 = arith.constant dense<0.000000e+00> : vector<2x128xf32>
    %77 = tpu.matmul %55, %2, %cst_21 {dimension_numbers = #tpu.dot_dimension_numbers<[1], [0], [0], [1], [0, 0, 1, 1], [], []>} : vector<2x32xf32>, vector<32x128xf32>, vector<2x128xf32> -> vector<2x128xf32>
    %78 = arith.addf %76, %77 : vector<2x128xf32>
    %79 = arith.negf %78 : vector<2x128xf32>
    %80 = math.exp %79 : vector<2x128xf32>
    %cst_22 = arith.constant 1.000000e+00 : f32
    %81 = vector.broadcast %cst_22 : f32 to vector<2x128xf32>
    %82 = arith.addf %81, %80 : vector<2x128xf32>
    %83 = arith.divf %81, %82 : vector<2x128xf32>
    %84 = math.tanh %78 : vector<2x128xf32>
    %85 = vector.extract_strided_slice %83 {offsets = [0, 0], sizes = [2, 32], strides = [1, 1]} : vector<2x128xf32> to vector<2x32xf32>
    %86 = vector.extract_strided_slice %83 {offsets = [0, 32], sizes = [2, 32], strides = [1, 1]} : vector<2x128xf32> to vector<2x32xf32>
    %87 = vector.extract_strided_slice %84 {offsets = [0, 64], sizes = [2, 32], strides = [1, 1]} : vector<2x128xf32> to vector<2x32xf32>
    %88 = vector.extract_strided_slice %83 {offsets = [0, 96], sizes = [2, 32], strides = [1, 1]} : vector<2x128xf32> to vector<2x32xf32>
    %89 = arith.mulf %86, %53 : vector<2x32xf32>
    %90 = arith.mulf %85, %87 : vector<2x32xf32>
    %91 = arith.addf %89, %90 : vector<2x32xf32>
    %92 = math.tanh %91 : vector<2x32xf32>
    %93 = arith.mulf %88, %92 : vector<2x32xf32>
    %cst_23 = arith.constant dense<0.000000e+00> : vector<2x128xf32>
    %94 = tpu.matmul %93, %1, %cst_23 {dimension_numbers = #tpu.dot_dimension_numbers<[1], [0], [0], [1], [0, 0, 1, 1], [], []>} : vector<2x32xf32>, vector<32x128xf32>, vector<2x128xf32> -> vector<2x128xf32>
    %95 = vector.broadcast %5 : vector<1x128xf32> to vector<2x128xf32>
    %96 = arith.addf %94, %95 : vector<2x128xf32>
    %cst_24 = arith.constant dense<0.000000e+00> : vector<2x128xf32>
    %97 = tpu.matmul %75, %3, %cst_24 {dimension_numbers = #tpu.dot_dimension_numbers<[1], [0], [0], [1], [0, 0, 1, 1], [], []>} : vector<2x32xf32>, vector<32x128xf32>, vector<2x128xf32> -> vector<2x128xf32>
    %98 = arith.addf %96, %97 : vector<2x128xf32>
    %99 = arith.negf %98 : vector<2x128xf32>
    %100 = math.exp %99 : vector<2x128xf32>
    %cst_25 = arith.constant 1.000000e+00 : f32
    %101 = vector.broadcast %cst_25 : f32 to vector<2x128xf32>
    %102 = arith.addf %101, %100 : vector<2x128xf32>
    %103 = arith.divf %101, %102 : vector<2x128xf32>
    %104 = math.tanh %98 : vector<2x128xf32>
    %105 = vector.extract_strided_slice %103 {offsets = [0, 0], sizes = [2, 32], strides = [1, 1]} : vector<2x128xf32> to vector<2x32xf32>
    %106 = vector.extract_strided_slice %103 {offsets = [0, 32], sizes = [2, 32], strides = [1, 1]} : vector<2x128xf32> to vector<2x32xf32>
    %107 = vector.extract_strided_slice %104 {offsets = [0, 64], sizes = [2, 32], strides = [1, 1]} : vector<2x128xf32> to vector<2x32xf32>
    %108 = vector.extract_strided_slice %103 {offsets = [0, 96], sizes = [2, 32], strides = [1, 1]} : vector<2x128xf32> to vector<2x32xf32>
    %109 = arith.mulf %106, %73 : vector<2x32xf32>
    %110 = arith.mulf %105, %107 : vector<2x32xf32>
    %111 = arith.addf %109, %110 : vector<2x32xf32>
    %112 = math.tanh %111 : vector<2x32xf32>
    %113 = arith.mulf %108, %112 : vector<2x32xf32>
    %114 = vector.extract_strided_slice %9 {offsets = [6, 0], sizes = [2, 128], strides = [1, 1]} : vector<16x128xf32> to vector<2x128xf32>
    %cst_26 = arith.constant dense<0.000000e+00> : vector<2x128xf32>
    %115 = tpu.matmul %93, %2, %cst_26 {dimension_numbers = #tpu.dot_dimension_numbers<[1], [0], [0], [1], [0, 0, 1, 1], [], []>} : vector<2x32xf32>, vector<32x128xf32>, vector<2x128xf32> -> vector<2x128xf32>
    %116 = arith.addf %114, %115 : vector<2x128xf32>
    %117 = arith.negf %116 : vector<2x128xf32>
    %118 = math.exp %117 : vector<2x128xf32>
    %cst_27 = arith.constant 1.000000e+00 : f32
    %119 = vector.broadcast %cst_27 : f32 to vector<2x128xf32>
    %120 = arith.addf %119, %118 : vector<2x128xf32>
    %121 = arith.divf %119, %120 : vector<2x128xf32>
    %122 = math.tanh %116 : vector<2x128xf32>
    %123 = vector.extract_strided_slice %121 {offsets = [0, 0], sizes = [2, 32], strides = [1, 1]} : vector<2x128xf32> to vector<2x32xf32>
    %124 = vector.extract_strided_slice %121 {offsets = [0, 32], sizes = [2, 32], strides = [1, 1]} : vector<2x128xf32> to vector<2x32xf32>
    %125 = vector.extract_strided_slice %122 {offsets = [0, 64], sizes = [2, 32], strides = [1, 1]} : vector<2x128xf32> to vector<2x32xf32>
    %126 = vector.extract_strided_slice %121 {offsets = [0, 96], sizes = [2, 32], strides = [1, 1]} : vector<2x128xf32> to vector<2x32xf32>
    %127 = arith.mulf %124, %91 : vector<2x32xf32>
    %128 = arith.mulf %123, %125 : vector<2x32xf32>
    %129 = arith.addf %127, %128 : vector<2x32xf32>
    %130 = math.tanh %129 : vector<2x32xf32>
    %131 = arith.mulf %126, %130 : vector<2x32xf32>
    %cst_28 = arith.constant dense<0.000000e+00> : vector<2x128xf32>
    %132 = tpu.matmul %131, %1, %cst_28 {dimension_numbers = #tpu.dot_dimension_numbers<[1], [0], [0], [1], [0, 0, 1, 1], [], []>} : vector<2x32xf32>, vector<32x128xf32>, vector<2x128xf32> -> vector<2x128xf32>
    %133 = vector.broadcast %5 : vector<1x128xf32> to vector<2x128xf32>
    %134 = arith.addf %132, %133 : vector<2x128xf32>
    %cst_29 = arith.constant dense<0.000000e+00> : vector<2x128xf32>
    %135 = tpu.matmul %113, %3, %cst_29 {dimension_numbers = #tpu.dot_dimension_numbers<[1], [0], [0], [1], [0, 0, 1, 1], [], []>} : vector<2x32xf32>, vector<32x128xf32>, vector<2x128xf32> -> vector<2x128xf32>
    %136 = arith.addf %134, %135 : vector<2x128xf32>
    %137 = arith.negf %136 : vector<2x128xf32>
    %138 = math.exp %137 : vector<2x128xf32>
    %cst_30 = arith.constant 1.000000e+00 : f32
    %139 = vector.broadcast %cst_30 : f32 to vector<2x128xf32>
    %140 = arith.addf %139, %138 : vector<2x128xf32>
    %141 = arith.divf %139, %140 : vector<2x128xf32>
    %142 = math.tanh %136 : vector<2x128xf32>
    %143 = vector.extract_strided_slice %141 {offsets = [0, 0], sizes = [2, 32], strides = [1, 1]} : vector<2x128xf32> to vector<2x32xf32>
    %144 = vector.extract_strided_slice %141 {offsets = [0, 32], sizes = [2, 32], strides = [1, 1]} : vector<2x128xf32> to vector<2x32xf32>
    %145 = vector.extract_strided_slice %142 {offsets = [0, 64], sizes = [2, 32], strides = [1, 1]} : vector<2x128xf32> to vector<2x32xf32>
    %146 = vector.extract_strided_slice %141 {offsets = [0, 96], sizes = [2, 32], strides = [1, 1]} : vector<2x128xf32> to vector<2x32xf32>
    %147 = arith.mulf %144, %111 : vector<2x32xf32>
    %148 = arith.mulf %143, %145 : vector<2x32xf32>
    %149 = arith.addf %147, %148 : vector<2x32xf32>
    %150 = math.tanh %149 : vector<2x32xf32>
    %151 = arith.mulf %146, %150 : vector<2x32xf32>
    %152 = vector.extract_strided_slice %9 {offsets = [8, 0], sizes = [2, 128], strides = [1, 1]} : vector<16x128xf32> to vector<2x128xf32>
    %cst_31 = arith.constant dense<0.000000e+00> : vector<2x128xf32>
    %153 = tpu.matmul %131, %2, %cst_31 {dimension_numbers = #tpu.dot_dimension_numbers<[1], [0], [0], [1], [0, 0, 1, 1], [], []>} : vector<2x32xf32>, vector<32x128xf32>, vector<2x128xf32> -> vector<2x128xf32>
    %154 = arith.addf %152, %153 : vector<2x128xf32>
    %155 = arith.negf %154 : vector<2x128xf32>
    %156 = math.exp %155 : vector<2x128xf32>
    %cst_32 = arith.constant 1.000000e+00 : f32
    %157 = vector.broadcast %cst_32 : f32 to vector<2x128xf32>
    %158 = arith.addf %157, %156 : vector<2x128xf32>
    %159 = arith.divf %157, %158 : vector<2x128xf32>
    %160 = math.tanh %154 : vector<2x128xf32>
    %161 = vector.extract_strided_slice %159 {offsets = [0, 0], sizes = [2, 32], strides = [1, 1]} : vector<2x128xf32> to vector<2x32xf32>
    %162 = vector.extract_strided_slice %159 {offsets = [0, 32], sizes = [2, 32], strides = [1, 1]} : vector<2x128xf32> to vector<2x32xf32>
    %163 = vector.extract_strided_slice %160 {offsets = [0, 64], sizes = [2, 32], strides = [1, 1]} : vector<2x128xf32> to vector<2x32xf32>
    %164 = vector.extract_strided_slice %159 {offsets = [0, 96], sizes = [2, 32], strides = [1, 1]} : vector<2x128xf32> to vector<2x32xf32>
    %165 = arith.mulf %162, %129 : vector<2x32xf32>
    %166 = arith.mulf %161, %163 : vector<2x32xf32>
    %167 = arith.addf %165, %166 : vector<2x32xf32>
    %168 = math.tanh %167 : vector<2x32xf32>
    %169 = arith.mulf %164, %168 : vector<2x32xf32>
    %cst_33 = arith.constant dense<0.000000e+00> : vector<2x128xf32>
    %170 = tpu.matmul %169, %1, %cst_33 {dimension_numbers = #tpu.dot_dimension_numbers<[1], [0], [0], [1], [0, 0, 1, 1], [], []>} : vector<2x32xf32>, vector<32x128xf32>, vector<2x128xf32> -> vector<2x128xf32>
    %171 = vector.broadcast %5 : vector<1x128xf32> to vector<2x128xf32>
    %172 = arith.addf %170, %171 : vector<2x128xf32>
    %cst_34 = arith.constant dense<0.000000e+00> : vector<2x128xf32>
    %173 = tpu.matmul %151, %3, %cst_34 {dimension_numbers = #tpu.dot_dimension_numbers<[1], [0], [0], [1], [0, 0, 1, 1], [], []>} : vector<2x32xf32>, vector<32x128xf32>, vector<2x128xf32> -> vector<2x128xf32>
    %174 = arith.addf %172, %173 : vector<2x128xf32>
    %175 = arith.negf %174 : vector<2x128xf32>
    %176 = math.exp %175 : vector<2x128xf32>
    %cst_35 = arith.constant 1.000000e+00 : f32
    %177 = vector.broadcast %cst_35 : f32 to vector<2x128xf32>
    %178 = arith.addf %177, %176 : vector<2x128xf32>
    %179 = arith.divf %177, %178 : vector<2x128xf32>
    %180 = math.tanh %174 : vector<2x128xf32>
    %181 = vector.extract_strided_slice %179 {offsets = [0, 0], sizes = [2, 32], strides = [1, 1]} : vector<2x128xf32> to vector<2x32xf32>
    %182 = vector.extract_strided_slice %179 {offsets = [0, 32], sizes = [2, 32], strides = [1, 1]} : vector<2x128xf32> to vector<2x32xf32>
    %183 = vector.extract_strided_slice %180 {offsets = [0, 64], sizes = [2, 32], strides = [1, 1]} : vector<2x128xf32> to vector<2x32xf32>
    %184 = vector.extract_strided_slice %179 {offsets = [0, 96], sizes = [2, 32], strides = [1, 1]} : vector<2x128xf32> to vector<2x32xf32>
    %185 = arith.mulf %182, %149 : vector<2x32xf32>
    %186 = arith.mulf %181, %183 : vector<2x32xf32>
    %187 = arith.addf %185, %186 : vector<2x32xf32>
    %188 = math.tanh %187 : vector<2x32xf32>
    %189 = arith.mulf %184, %188 : vector<2x32xf32>
    %190 = vector.extract_strided_slice %9 {offsets = [10, 0], sizes = [2, 128], strides = [1, 1]} : vector<16x128xf32> to vector<2x128xf32>
    %cst_36 = arith.constant dense<0.000000e+00> : vector<2x128xf32>
    %191 = tpu.matmul %169, %2, %cst_36 {dimension_numbers = #tpu.dot_dimension_numbers<[1], [0], [0], [1], [0, 0, 1, 1], [], []>} : vector<2x32xf32>, vector<32x128xf32>, vector<2x128xf32> -> vector<2x128xf32>
    %192 = arith.addf %190, %191 : vector<2x128xf32>
    %193 = arith.negf %192 : vector<2x128xf32>
    %194 = math.exp %193 : vector<2x128xf32>
    %cst_37 = arith.constant 1.000000e+00 : f32
    %195 = vector.broadcast %cst_37 : f32 to vector<2x128xf32>
    %196 = arith.addf %195, %194 : vector<2x128xf32>
    %197 = arith.divf %195, %196 : vector<2x128xf32>
    %198 = math.tanh %192 : vector<2x128xf32>
    %199 = vector.extract_strided_slice %197 {offsets = [0, 0], sizes = [2, 32], strides = [1, 1]} : vector<2x128xf32> to vector<2x32xf32>
    %200 = vector.extract_strided_slice %197 {offsets = [0, 32], sizes = [2, 32], strides = [1, 1]} : vector<2x128xf32> to vector<2x32xf32>
    %201 = vector.extract_strided_slice %198 {offsets = [0, 64], sizes = [2, 32], strides = [1, 1]} : vector<2x128xf32> to vector<2x32xf32>
    %202 = vector.extract_strided_slice %197 {offsets = [0, 96], sizes = [2, 32], strides = [1, 1]} : vector<2x128xf32> to vector<2x32xf32>
    %203 = arith.mulf %200, %167 : vector<2x32xf32>
    %204 = arith.mulf %199, %201 : vector<2x32xf32>
    %205 = arith.addf %203, %204 : vector<2x32xf32>
    %206 = math.tanh %205 : vector<2x32xf32>
    %207 = arith.mulf %202, %206 : vector<2x32xf32>
    %cst_38 = arith.constant dense<0.000000e+00> : vector<2x128xf32>
    %208 = tpu.matmul %207, %1, %cst_38 {dimension_numbers = #tpu.dot_dimension_numbers<[1], [0], [0], [1], [0, 0, 1, 1], [], []>} : vector<2x32xf32>, vector<32x128xf32>, vector<2x128xf32> -> vector<2x128xf32>
    %209 = vector.broadcast %5 : vector<1x128xf32> to vector<2x128xf32>
    %210 = arith.addf %208, %209 : vector<2x128xf32>
    %cst_39 = arith.constant dense<0.000000e+00> : vector<2x128xf32>
    %211 = tpu.matmul %189, %3, %cst_39 {dimension_numbers = #tpu.dot_dimension_numbers<[1], [0], [0], [1], [0, 0, 1, 1], [], []>} : vector<2x32xf32>, vector<32x128xf32>, vector<2x128xf32> -> vector<2x128xf32>
    %212 = arith.addf %210, %211 : vector<2x128xf32>
    %213 = arith.negf %212 : vector<2x128xf32>
    %214 = math.exp %213 : vector<2x128xf32>
    %cst_40 = arith.constant 1.000000e+00 : f32
    %215 = vector.broadcast %cst_40 : f32 to vector<2x128xf32>
    %216 = arith.addf %215, %214 : vector<2x128xf32>
    %217 = arith.divf %215, %216 : vector<2x128xf32>
    %218 = math.tanh %212 : vector<2x128xf32>
    %219 = vector.extract_strided_slice %217 {offsets = [0, 0], sizes = [2, 32], strides = [1, 1]} : vector<2x128xf32> to vector<2x32xf32>
    %220 = vector.extract_strided_slice %217 {offsets = [0, 32], sizes = [2, 32], strides = [1, 1]} : vector<2x128xf32> to vector<2x32xf32>
    %221 = vector.extract_strided_slice %218 {offsets = [0, 64], sizes = [2, 32], strides = [1, 1]} : vector<2x128xf32> to vector<2x32xf32>
    %222 = vector.extract_strided_slice %217 {offsets = [0, 96], sizes = [2, 32], strides = [1, 1]} : vector<2x128xf32> to vector<2x32xf32>
    %223 = arith.mulf %220, %187 : vector<2x32xf32>
    %224 = arith.mulf %219, %221 : vector<2x32xf32>
    %225 = arith.addf %223, %224 : vector<2x32xf32>
    %226 = math.tanh %225 : vector<2x32xf32>
    %227 = arith.mulf %222, %226 : vector<2x32xf32>
    %228 = vector.extract_strided_slice %9 {offsets = [12, 0], sizes = [2, 128], strides = [1, 1]} : vector<16x128xf32> to vector<2x128xf32>
    %cst_41 = arith.constant dense<0.000000e+00> : vector<2x128xf32>
    %229 = tpu.matmul %207, %2, %cst_41 {dimension_numbers = #tpu.dot_dimension_numbers<[1], [0], [0], [1], [0, 0, 1, 1], [], []>} : vector<2x32xf32>, vector<32x128xf32>, vector<2x128xf32> -> vector<2x128xf32>
    %230 = arith.addf %228, %229 : vector<2x128xf32>
    %231 = arith.negf %230 : vector<2x128xf32>
    %232 = math.exp %231 : vector<2x128xf32>
    %cst_42 = arith.constant 1.000000e+00 : f32
    %233 = vector.broadcast %cst_42 : f32 to vector<2x128xf32>
    %234 = arith.addf %233, %232 : vector<2x128xf32>
    %235 = arith.divf %233, %234 : vector<2x128xf32>
    %236 = math.tanh %230 : vector<2x128xf32>
    %237 = vector.extract_strided_slice %235 {offsets = [0, 0], sizes = [2, 32], strides = [1, 1]} : vector<2x128xf32> to vector<2x32xf32>
    %238 = vector.extract_strided_slice %235 {offsets = [0, 32], sizes = [2, 32], strides = [1, 1]} : vector<2x128xf32> to vector<2x32xf32>
    %239 = vector.extract_strided_slice %236 {offsets = [0, 64], sizes = [2, 32], strides = [1, 1]} : vector<2x128xf32> to vector<2x32xf32>
    %240 = vector.extract_strided_slice %235 {offsets = [0, 96], sizes = [2, 32], strides = [1, 1]} : vector<2x128xf32> to vector<2x32xf32>
    %241 = arith.mulf %238, %205 : vector<2x32xf32>
    %242 = arith.mulf %237, %239 : vector<2x32xf32>
    %243 = arith.addf %241, %242 : vector<2x32xf32>
    %244 = math.tanh %243 : vector<2x32xf32>
    %245 = arith.mulf %240, %244 : vector<2x32xf32>
    %cst_43 = arith.constant dense<0.000000e+00> : vector<2x128xf32>
    %246 = tpu.matmul %245, %1, %cst_43 {dimension_numbers = #tpu.dot_dimension_numbers<[1], [0], [0], [1], [0, 0, 1, 1], [], []>} : vector<2x32xf32>, vector<32x128xf32>, vector<2x128xf32> -> vector<2x128xf32>
    %247 = vector.broadcast %5 : vector<1x128xf32> to vector<2x128xf32>
    %248 = arith.addf %246, %247 : vector<2x128xf32>
    %cst_44 = arith.constant dense<0.000000e+00> : vector<2x128xf32>
    %249 = tpu.matmul %227, %3, %cst_44 {dimension_numbers = #tpu.dot_dimension_numbers<[1], [0], [0], [1], [0, 0, 1, 1], [], []>} : vector<2x32xf32>, vector<32x128xf32>, vector<2x128xf32> -> vector<2x128xf32>
    %250 = arith.addf %248, %249 : vector<2x128xf32>
    %251 = arith.negf %250 : vector<2x128xf32>
    %252 = math.exp %251 : vector<2x128xf32>
    %cst_45 = arith.constant 1.000000e+00 : f32
    %253 = vector.broadcast %cst_45 : f32 to vector<2x128xf32>
    %254 = arith.addf %253, %252 : vector<2x128xf32>
    %255 = arith.divf %253, %254 : vector<2x128xf32>
    %256 = math.tanh %250 : vector<2x128xf32>
    %257 = vector.extract_strided_slice %255 {offsets = [0, 0], sizes = [2, 32], strides = [1, 1]} : vector<2x128xf32> to vector<2x32xf32>
    %258 = vector.extract_strided_slice %255 {offsets = [0, 32], sizes = [2, 32], strides = [1, 1]} : vector<2x128xf32> to vector<2x32xf32>
    %259 = vector.extract_strided_slice %256 {offsets = [0, 64], sizes = [2, 32], strides = [1, 1]} : vector<2x128xf32> to vector<2x32xf32>
    %260 = vector.extract_strided_slice %255 {offsets = [0, 96], sizes = [2, 32], strides = [1, 1]} : vector<2x128xf32> to vector<2x32xf32>
    %261 = arith.mulf %258, %225 : vector<2x32xf32>
    %262 = arith.mulf %257, %259 : vector<2x32xf32>
    %263 = arith.addf %261, %262 : vector<2x32xf32>
    %264 = math.tanh %263 : vector<2x32xf32>
    %265 = arith.mulf %260, %264 : vector<2x32xf32>
    %266 = vector.extract_strided_slice %9 {offsets = [14, 0], sizes = [2, 128], strides = [1, 1]} : vector<16x128xf32> to vector<2x128xf32>
    %cst_46 = arith.constant dense<0.000000e+00> : vector<2x128xf32>
    %267 = tpu.matmul %245, %2, %cst_46 {dimension_numbers = #tpu.dot_dimension_numbers<[1], [0], [0], [1], [0, 0, 1, 1], [], []>} : vector<2x32xf32>, vector<32x128xf32>, vector<2x128xf32> -> vector<2x128xf32>
    %268 = arith.addf %266, %267 : vector<2x128xf32>
    %269 = arith.negf %268 : vector<2x128xf32>
    %270 = math.exp %269 : vector<2x128xf32>
    %cst_47 = arith.constant 1.000000e+00 : f32
    %271 = vector.broadcast %cst_47 : f32 to vector<2x128xf32>
    %272 = arith.addf %271, %270 : vector<2x128xf32>
    %273 = arith.divf %271, %272 : vector<2x128xf32>
    %274 = math.tanh %268 : vector<2x128xf32>
    %275 = vector.extract_strided_slice %273 {offsets = [0, 0], sizes = [2, 32], strides = [1, 1]} : vector<2x128xf32> to vector<2x32xf32>
    %276 = vector.extract_strided_slice %273 {offsets = [0, 32], sizes = [2, 32], strides = [1, 1]} : vector<2x128xf32> to vector<2x32xf32>
    %277 = vector.extract_strided_slice %274 {offsets = [0, 64], sizes = [2, 32], strides = [1, 1]} : vector<2x128xf32> to vector<2x32xf32>
    %278 = vector.extract_strided_slice %273 {offsets = [0, 96], sizes = [2, 32], strides = [1, 1]} : vector<2x128xf32> to vector<2x32xf32>
    %279 = arith.mulf %276, %243 : vector<2x32xf32>
    %280 = arith.mulf %275, %277 : vector<2x32xf32>
    %281 = arith.addf %279, %280 : vector<2x32xf32>
    %282 = math.tanh %281 : vector<2x32xf32>
    %283 = arith.mulf %278, %282 : vector<2x32xf32>
    %cst_48 = arith.constant dense<0.000000e+00> : vector<2x128xf32>
    %284 = tpu.matmul %283, %1, %cst_48 {dimension_numbers = #tpu.dot_dimension_numbers<[1], [0], [0], [1], [0, 0, 1, 1], [], []>} : vector<2x32xf32>, vector<32x128xf32>, vector<2x128xf32> -> vector<2x128xf32>
    %285 = vector.broadcast %5 : vector<1x128xf32> to vector<2x128xf32>
    %286 = arith.addf %284, %285 : vector<2x128xf32>
    %cst_49 = arith.constant dense<0.000000e+00> : vector<2x128xf32>
    %287 = tpu.matmul %265, %3, %cst_49 {dimension_numbers = #tpu.dot_dimension_numbers<[1], [0], [0], [1], [0, 0, 1, 1], [], []>} : vector<2x32xf32>, vector<32x128xf32>, vector<2x128xf32> -> vector<2x128xf32>
    %288 = arith.addf %286, %287 : vector<2x128xf32>
    %289 = arith.negf %288 : vector<2x128xf32>
    %290 = math.exp %289 : vector<2x128xf32>
    %cst_50 = arith.constant 1.000000e+00 : f32
    %291 = vector.broadcast %cst_50 : f32 to vector<2x128xf32>
    %292 = arith.addf %291, %290 : vector<2x128xf32>
    %293 = arith.divf %291, %292 : vector<2x128xf32>
    %294 = math.tanh %288 : vector<2x128xf32>
    %295 = vector.extract_strided_slice %293 {offsets = [0, 0], sizes = [2, 32], strides = [1, 1]} : vector<2x128xf32> to vector<2x32xf32>
    %296 = vector.extract_strided_slice %293 {offsets = [0, 32], sizes = [2, 32], strides = [1, 1]} : vector<2x128xf32> to vector<2x32xf32>
    %297 = vector.extract_strided_slice %294 {offsets = [0, 64], sizes = [2, 32], strides = [1, 1]} : vector<2x128xf32> to vector<2x32xf32>
    %298 = vector.extract_strided_slice %293 {offsets = [0, 96], sizes = [2, 32], strides = [1, 1]} : vector<2x128xf32> to vector<2x32xf32>
    %299 = arith.mulf %296, %263 : vector<2x32xf32>
    %300 = arith.mulf %295, %297 : vector<2x32xf32>
    %301 = arith.addf %299, %300 : vector<2x32xf32>
    %302 = math.tanh %301 : vector<2x32xf32>
    %303 = arith.mulf %298, %302 : vector<2x32xf32>
    %c0_51 = arith.constant 0 : index
    %c0_52 = arith.constant 0 : index
    %304 = vector.load %arg12[%c0_51, %c0_52] : memref<2x32xf32, #tpu.memory_space<vmem>>, vector<2x32xf32>
    tpu.vector_store %arg12[%c0_51, %c0_52], %303 {strides = array<i32>} : memref<2x32xf32, #tpu.memory_space<vmem>>, vector<2x32xf32>,
    %c0_53 = arith.constant 0 : index
    %c0_54 = arith.constant 0 : index
    %305 = vector.load %arg7[%c0_53, %c0_54] : memref<32x32xf32, #tpu.memory_space<vmem>>, vector<32x32xf32>
    %cst_55 = arith.constant dense<0.000000e+00> : vector<2x32xf32>
    %306 = tpu.matmul %303, %305, %cst_55 {dimension_numbers = #tpu.dot_dimension_numbers<[1], [0], [0], [1], [0, 0, 1, 1], [], []>} : vector<2x32xf32>, vector<32x32xf32>, vector<2x32xf32> -> vector<2x32xf32>
    %c0_56 = arith.constant 0 : index
    %c0_57 = arith.constant 0 : index
    %307 = vector.load %arg8[%c0_56, %c0_57] : memref<1x32xf32, #tpu.memory_space<vmem>>, vector<1x32xf32>
    %308 = vector.broadcast %307 : vector<1x32xf32> to vector<2x32xf32>
    %309 = arith.addf %306, %308 : vector<2x32xf32>
    %310 = math.tanh %309 : vector<2x32xf32>
    %c0_58 = arith.constant 0 : index
    %c0_59 = arith.constant 0 : index
    %311 = vector.load %arg9[%c0_58, %c0_59] : memref<32x8xf32, #tpu.memory_space<vmem>>, vector<32x8xf32>
    %cst_60 = arith.constant dense<0.000000e+00> : vector<2x8xf32>
    %312 = tpu.matmul %310, %311, %cst_60 {dimension_numbers = #tpu.dot_dimension_numbers<[1], [0], [0], [1], [0, 0, 1, 1], [], []>} : vector<2x32xf32>, vector<32x8xf32>, vector<2x8xf32> -> vector<2x8xf32>
    %c0_61 = arith.constant 0 : index
    %c0_62 = arith.constant 0 : index
    %313 = vector.load %arg10[%c0_61, %c0_62] : memref<1x8xf32, #tpu.memory_space<vmem>>, vector<1x8xf32>
    %314 = vector.broadcast %313 : vector<1x8xf32> to vector<2x8xf32>
    %315 = arith.addf %312, %314 : vector<2x8xf32>
    %c0_63 = arith.constant 0 : index
    %c0_64 = arith.constant 0 : index
    %316 = vector.load %arg11[%c0_63, %c0_64] : memref<2x8xf32, #tpu.memory_space<vmem>>, vector<2x8xf32>
    tpu.vector_store %arg11[%c0_63, %c0_64], %315 {strides = array<i32>} : memref<2x8xf32, #tpu.memory_space<vmem>>, vector<2x8xf32>,
    return
  }
}

</mosaic_0001>

<llo_original>
// kernel: tpu_custom_call.1
$region0: #{tpu_custom_call.1}
  #allocation0 [shape = 'u32[]', space=smem, size = 0x4, offset = 0x4, fixed_abs, tag = 'smem constant byte address 0x4 - core index']
  #allocation1 [shape = 'u32[144,128]{1,0:T(1,128)}', space=vmem, size = 0x12000, scoped, tag = 'internal scratch']
  %s0 = inlined_call_operand.hbm [shape: f32[16,16], index: 0, kind: input, shape index: {}]
  %s1 = inlined_call_operand.hbm [shape: f32[16,128], index: 1, kind: input, shape index: {}]
  %s2 = inlined_call_operand.vmem [shape: f32[32,128], index: 2, kind: input, shape index: {}]
  %s3 = inlined_call_operand.vmem [shape: f32[1,128], index: 3, kind: input, shape index: {}]
  %s4 = inlined_call_operand.hbm [shape: f32[32,128], index: 4, kind: input, shape index: {}]
  %s5 = inlined_call_operand.hbm [shape: f32[32,128], index: 5, kind: input, shape index: {}]
  %s6 = inlined_call_operand.vmem [shape: f32[1,128], index: 6, kind: input, shape index: {}]
  %s7 = inlined_call_operand.vmem [shape: f32[32,32], index: 7, kind: input, shape index: {}]
  %s8 = inlined_call_operand.hbm [shape: f32[1,32], index: 8, kind: input, shape index: {}]
  %s9 = inlined_call_operand.vmem [shape: f32[32,8], index: 9, kind: input, shape index: {}]
  %s10 = inlined_call_operand.vmem [shape: f32[1,8], index: 10, kind: input, shape index: {}]
  %s11 = inlined_call_operand.hbm [shape: f32[2,8], index: 11, kind: output, shape index: {0}]
  %s12 = inlined_call_operand.hbm [shape: f32[2,32], index: 12, kind: output, shape index: {1}]
  %13 = xla_tuple %s11, %s12
  %s14 = sld [smem:[#allocation0]]
  $region82: #{tpu_custom_call.1} parent=0
    _
  %s16 = ssub.s32 1, %s14
  %s17 = scalar_select 0, %s16, %s14
  $region1: #{tpu_custom_call.1} parent=0
    #allocation2 [shape = 'u8[8192]{0}', space=vmem, size = 0x2000, scoped, tag = 'input window, operand 0, single buffered']
    #allocation3 [shape = 's32[1]{0}', space=sflag, size = 0x4, scoped, tag = 'scoped memory for tpu_custom_call.1']
    #allocation4 [shape = 's32[1]{0}', space=sflag, size = 0x4, scoped, tag = 'scoped memory for tpu_custom_call.1']
    #allocation5 [shape = 'u8[8192]{0}', space=vmem, size = 0x2000, scoped, tag = 'input window, operand 1, single buffered']
    #allocation6 [shape = 's32[1]{0}', space=sflag, size = 0x4, scoped, tag = 'scoped memory for tpu_custom_call.1']
    #allocation7 [shape = 'u8[16384]{0}', space=vmem, size = 0x4000, scoped, tag = 'input window, operand 4, single buffered']
    #allocation8 [shape = 'u8[16384]{0}', space=vmem, size = 0x4000, scoped, tag = 'input window, operand 5, single buffered']
    #allocation9 [shape = 's32[1]{0}', space=sflag, size = 0x4, scoped, tag = 'scoped memory for tpu_custom_call.1']
    #allocation10 [shape = 'u8[512]{0}', space=vmem, size = 0x400, scoped, tag = 'input window, operand 8, single buffered']
    #allocation11 [shape = 'u8[1024]{0}', space=vmem, size = 0x400, scoped, tag = 'output window, operand 0, single buffered']
    #allocation12 [shape = 'u8[1024]{0}', space=vmem, size = 0x400, scoped, tag = 'output window, operand 1, single buffered']
    #allocation13 [shape = 's32[1]{0}', space=sflag, size = 0x4, scoped, tag = 'scoped memory for tpu_custom_call.1']
    %18 = vsyncpa [#allocation3], 0
    %19 = vsyncpa [#allocation6], 0
    %20 = vsyncpa [#allocation9], 0
    %21 = vsyncpa [#allocation4], 0
    %22 = vsyncpa [#allocation13], 0
    // Predicated region
    $region2: #{tpu_custom_call.1} parent=1 // pred_check
      _
    $region3: #{tpu_custom_call.1} parent=1 // pred_check_branch
      %24 = sbr.rel (0) target = $region5
    $region4: #{tpu_custom_call.1} parent=1 // pred_region
      %s26 = ssub.s32 256, 256
      %27 = vsyncadd [#allocation3], %s26
      %s28 = sshll.u32 [#allocation2], 4
      %s29 = int_to_ptr.vmem [resolvable:$true] %s28
      %34 = dma.hbm_to_vmem [thread:$0]  %s0, 256, %s29, [#allocation3], 128, 128, 8
    $region5: #{tpu_custom_call.1} parent=1 // pred_fallthru
      _
    // Predicated region
    $region6: #{tpu_custom_call.1} parent=1 // pred_check
      _
    $region7: #{tpu_custom_call.1} parent=1 // pred_check_branch
      %36 = sbr.rel (0) target = $region9
    $region8: #{tpu_custom_call.1} parent=1 // pred_region
      %s38 = ssub.s32 256, 256
      %39 = vsyncadd [#allocation6], %s38
      %s40 = sshll.u32 [#allocation5], 4
      %s41 = int_to_ptr.vmem [resolvable:$true] %s40
      %46 = dma.hbm_to_vmem [thread:$0]  %s1, 256, %s41, [#allocation6], 128, 128, 8
    $region9: #{tpu_custom_call.1} parent=1 // pred_fallthru
      _
    // Predicated region
    $region10: #{tpu_custom_call.1} parent=1 // pred_check
      _
    $region11: #{tpu_custom_call.1} parent=1 // pred_check_branch
      %48 = sbr.rel (0) target = $region13
    $region12: #{tpu_custom_call.1} parent=1 // pred_region
      _
    $region13: #{tpu_custom_call.1} parent=1 // pred_fallthru
      _
    // Predicated region
    $region14: #{tpu_custom_call.1} parent=1 // pred_check
      _
    $region15: #{tpu_custom_call.1} parent=1 // pred_check_branch
      %50 = sbr.rel (0) target = $region17
    $region16: #{tpu_custom_call.1} parent=1 // pred_region
      _
    $region17: #{tpu_custom_call.1} parent=1 // pred_fallthru
      _
    // Predicated region
    $region18: #{tpu_custom_call.1} parent=1 // pred_check
      _
    $region19: #{tpu_custom_call.1} parent=1 // pred_check_branch
      %52 = sbr.rel (0) target = $region21
    $region20: #{tpu_custom_call.1} parent=1 // pred_region
      %s54 = ssub.s32 512, 512
      %55 = vsyncadd [#allocation6], %s54
      %s56 = sshll.u32 [#allocation7], 4
      %s57 = int_to_ptr.vmem [resolvable:$true] %s56
      %62 = dma.hbm_to_vmem [thread:$0]  %s4, 512, %s57, [#allocation6], 128, 128, 8
    $region21: #{tpu_custom_call.1} parent=1 // pred_fallthru
      _
    // Predicated region
    $region22: #{tpu_custom_call.1} parent=1 // pred_check
      _
    $region23: #{tpu_custom_call.1} parent=1 // pred_check_branch
      %64 = sbr.rel (0) target = $region25
    $region24: #{tpu_custom_call.1} parent=1 // pred_region
      %s66 = ssub.s32 512, 512
      %67 = vsyncadd [#allocation9], %s66
      %s68 = sshll.u32 [#allocation8], 4
      %s69 = int_to_ptr.vmem [resolvable:$true] %s68
      %74 = dma.hbm_to_vmem [thread:$0]  %s5, 512, %s69, [#allocation9], 128, 128, 8
    $region25: #{tpu_custom_call.1} parent=1 // pred_fallthru
      _
    // Predicated region
    $region26: #{tpu_custom_call.1} parent=1 // pred_check
      _
    $region27: #{tpu_custom_call.1} parent=1 // pred_check_branch
      %76 = sbr.rel (0) target = $region29
    $region28: #{tpu_custom_call.1} parent=1 // pred_region
      _
    $region29: #{tpu_custom_call.1} parent=1 // pred_fallthru
      _
    // Predicated region
    $region30: #{tpu_custom_call.1} parent=1 // pred_check
      _
    $region31: #{tpu_custom_call.1} parent=1 // pred_check_branch
      %78 = sbr.rel (0) target = $region33
    $region32: #{tpu_custom_call.1} parent=1 // pred_region
      _
    $region33: #{tpu_custom_call.1} parent=1 // pred_fallthru
      _
    // Predicated region
    $region34: #{tpu_custom_call.1} parent=1 // pred_check
      _
    $region35: #{tpu_custom_call.1} parent=1 // pred_check_branch
      %80 = sbr.rel (0) target = $region37
    $region36: #{tpu_custom_call.1} parent=1 // pred_region
      %s82 = ssub.s32 16, 16
      %83 = vsyncadd [#allocation9], %s82
      %s85 = sshll.u32 [#allocation10], 4
      %s86 = int_to_ptr.vmem [resolvable:$true] %s85
      %88 = dma.hbm_to_vmem [thread:$0]  %s8, 16, %s86, [#allocation9]
    $region37: #{tpu_custom_call.1} parent=1 // pred_fallthru
      _
    // Predicated region
    $region38: #{tpu_custom_call.1} parent=1 // pred_check
      _
    $region39: #{tpu_custom_call.1} parent=1 // pred_check_branch
      %90 = sbr.rel (0) target = $region41
    $region40: #{tpu_custom_call.1} parent=1 // pred_region
      _
    $region41: #{tpu_custom_call.1} parent=1 // pred_fallthru
      _
    // Predicated region
    $region42: #{tpu_custom_call.1} parent=1 // pred_check
      _
    $region43: #{tpu_custom_call.1} parent=1 // pred_check_branch
      %92 = sbr.rel (0) target = $region45
    $region44: #{tpu_custom_call.1} parent=1 // pred_region
      _
    $region45: #{tpu_custom_call.1} parent=1 // pred_fallthru
      _
    // Predicated region
    $region46: #{tpu_custom_call.1} parent=1 // pred_check
      _
    $region47: #{tpu_custom_call.1} parent=1 // pred_check_branch
      %94 = sbr.rel (0) target = $region49
    $region48: #{tpu_custom_call.1} parent=1 // pred_region
      %95 = dma.done [#allocation3], 256
    $region49: #{tpu_custom_call.1} parent=1 // pred_fallthru
      _
    // Predicated region
    $region50: #{tpu_custom_call.1} parent=1 // pred_check
      _
    $region51: #{tpu_custom_call.1} parent=1 // pred_check_branch
      %97 = sbr.rel (0) target = $region53
    $region52: #{tpu_custom_call.1} parent=1 // pred_region
      %98 = dma.done [#allocation6], 256
    $region53: #{tpu_custom_call.1} parent=1 // pred_fallthru
      _
    // Predicated region
    $region54: #{tpu_custom_call.1} parent=1 // pred_check
      _
    $region55: #{tpu_custom_call.1} parent=1 // pred_check_branch
      %100 = sbr.rel (0) target = $region57
    $region56: #{tpu_custom_call.1} parent=1 // pred_region
      %101 = dma.done [#allocation6], 512
    $region57: #{tpu_custom_call.1} parent=1 // pred_fallthru
      _
    // Predicated region
    $region58: #{tpu_custom_call.1} parent=1 // pred_check
      _
    $region59: #{tpu_custom_call.1} parent=1 // pred_check_branch
      %103 = sbr.rel (0) target = $region61
    $region60: #{tpu_custom_call.1} parent=1 // pred_region
      %104 = dma.done [#allocation9], 512
    $region61: #{tpu_custom_call.1} parent=1 // pred_fallthru
      _
    // Predicated region
    $region62: #{tpu_custom_call.1} parent=1 // pred_check
      _
    $region63: #{tpu_custom_call.1} parent=1 // pred_check_branch
      %106 = sbr.rel (0) target = $region65
    $region64: #{tpu_custom_call.1} parent=1 // pred_region
      %107 = dma.done [#allocation9], 16
    $region65: #{tpu_custom_call.1} parent=1 // pred_fallthru
      _
    %v108 = vld [vmem:[#allocation5] sm:$0xff]
    %v109 = vld [vmem:[#allocation5 + $0x8] sm:$0xff]
    %v110 = vld [vmem:[#allocation7] sm:$0xff]
    %v111 = vld [vmem:[#allocation7 + $0x8] sm:$0xff]
    %v112 = vld [vmem:[#allocation7 + $0x10] sm:$0xff]
    %v113 = vld [vmem:[#allocation7 + $0x18] sm:$0xff]
    %v114 = vld [vmem:[%s2] sm:$0xff]
    %v115 = vld [vmem:[%s2 + $0x8] sm:$0xff]
    %v116 = vld [vmem:[%s2 + $0x10] sm:$0xff]
    %v117 = vld [vmem:[%s2 + $0x18] sm:$0xff]
    %v118 = vld [vmem:[#allocation8] sm:$0xff]
    %v119 = vld [vmem:[#allocation8 + $0x8] sm:$0xff]
    %v120 = vld [vmem:[#allocation8 + $0x10] sm:$0xff]
    %v121 = vld [vmem:[#allocation8 + $0x18] sm:$0xff]
    %v122 = vld [vmem:[%s3] sm:$0x1]
    %v123 = vld [vmem:[%s6] sm:$0x1]
    %v124 = vld [vmem:[#allocation2] sm:$0xff]
    %v125 = vld [vmem:[#allocation2 + $0x8] sm:$0xff]
    %v127 = vlaneseq
    %v128 = vshrl.u32 %v127, 7
    %v129 = vsub.s32 0, %v128
    %v130 = vrot.slane %v122, %v129
    %vm132 = vcmask 130048
    %v134 = vsel %vm132, %v124, 0
    %v137 = vsel %vm132, %v125, 0
    %139 = vmatprep.subr.mxu0 0.0
    %140 = vmatpush1.msra.mxu0 %v108
    %141 = vmatprep.subr.mxu0 0.0
    %142 = vmatpush1.msra.mxu0 %v109
    %143 = vmatprep.subr.mxu0 0.0
    %144 = vmatpush1.msra.mxu0 0.0
    %145 = vmatprep.subr.mxu0 0.0
    %146 = vmatpush1.msra.mxu0 0.0
    %147 = vmatprep.subr.mxu0 0.0
    %148 = vmatpush1.msra.mxu0 0.0
    %149 = vmatprep.subr.mxu0 0.0
    %150 = vmatpush1.msra.mxu0 0.0
    %151 = vmatprep.subr.mxu0 0.0
    %152 = vmatpush1.msra.mxu0 0.0
    %153 = vmatprep.subr.mxu0 0.0
    %154 = vmatpush1.msra.mxu0 0.0
    %155 = vmatprep.subr.mxu0 0.0
    %156 = vmatpush1.msra.mxu0 0.0
    %157 = vmatprep.subr.mxu0 0.0
    %158 = vmatpush1.msra.mxu0 0.0
    %159 = vmatprep.subr.mxu0 0.0
    %160 = vmatpush1.msra.mxu0 0.0
    %161 = vmatprep.subr.mxu0 0.0
    %162 = vmatpush1.msra.mxu0 0.0
    %163 = vmatprep.subr.mxu0 0.0
    %164 = vmatpush1.msra.mxu0 0.0
    %165 = vmatprep.subr.mxu0 0.0
    %166 = vmatpush1.msra.mxu0 0.0
    %167 = vmatprep.subr.mxu0 0.0
    %168 = vmatpush1.msra.mxu0 0.0
    %169 = vmatprep.subr.mxu0 0.0
    %170 = vmatpush1.msra.mxu0 0.0
    %171 = vmatprep.subr.mxu0 0.0
    %172 = vmatpush1.msra.mxu0 0.0
    %173 = vmatprep.subr.mxu0 0.0
    %174 = vmatpush1.msra.mxu0 0.0
    %175 = vmatprep.subr.mxu0 0.0
    %176 = vmatpush1.msra.mxu0 0.0
    %177 = vmatprep.subr.mxu0 0.0
    %178 = vmatpush1.msra.mxu0 0.0
    %179 = vmatprep.subr.mxu0 0.0
    %180 = vmatpush1.msra.mxu0 0.0
    %181 = vmatprep.subr.mxu0 0.0
    %182 = vmatpush1.msra.mxu0 0.0
    %183 = vmatprep.subr.mxu0 0.0
    %184 = vmatpush1.msra.mxu0 0.0
    %185 = vmatprep.subr.mxu0 0.0
    %186 = vmatpush1.msra.mxu0 0.0
    %187 = vmatprep.subr.mxu0 0.0
    %188 = vmatpush1.msra.mxu0 0.0
    %189 = vmatprep.subr.mxu0 0.0
    %190 = vmatpush1.msra.mxu0 0.0
    %191 = vmatprep.subr.mxu0 0.0
    %192 = vmatpush1.msra.mxu0 0.0
    %193 = vmatprep.subr.mxu0 0.0
    %194 = vmatpush1.msra.mxu0 0.0
    %195 = vmatprep.subr.mxu0 0.0
    %196 = vmatpush1.msra.mxu0 0.0
    %197 = vmatprep.subr.mxu0 0.0
    %198 = vmatpush1.msra.mxu0 0.0
    %199 = vmatprep.subr.mxu0 0.0
    %200 = vmatpush1.msra.mxu0 0.0
    %201 = vmatprep.subr.mxu0 0.0
    %202 = vmatpush1.msra.mxu0 0.0
    %203 = vmatprep.mubr.f32.mxu0 0.0
    %204 = vmatmul.mubr.f32.gmra.mrb[0].mxu0 %v134
    %v205 = vpop.f32.mrb[0].mxu0
    %v206 = vadd.f32 %v130, %v205
    %v207 = vpop.f32.mrb[0].mxu0
    %208 = vmatprep.mubr.f32.mxu0 0.0
    %209 = vmatmul.mubr.f32.gmra.mrb[0].mxu0 %v137
    %v210 = vpop.f32.mrb[0].mxu0
    %v211 = vadd.f32 %v130, %v210
    %v212 = vpop.f32.mrb[0].mxu0
    %213 = vdwg.mxu0
    %v214 = vxor.u32 %v206, 2147483648
    %v215 = vmul.f32 %v214, 1.442695
    %v216 = vpow.pop %v215
    %v217 = vadd.f32 %v216, 1.0
    %v218 = vrcp.pop %v217
    %v219 = vmul.f32 1.0, %v218
    %v220 = vtanh.pop %v206
    %222 = vrot.lane.b32.xlu0 %v220, 64
    %v223 = vpop.permute.xlu0 %222
    %v225 = vmul.f32 %v219, %v223
    %v226 = vtanh.pop %v225
    %228 = vrot.lane.b32.xlu0 %v226, 96
    %v229 = vpop.permute.xlu0 %228
    %v231 = vmul.f32 %v219, %v229
    %v233 = vlaneseq
    %v234 = vshrl.u32 %v233, 7
    %v235 = vsub.s32 0, %v234
    %v236 = vrot.slane %v123, %v235
    %239 = vrot.lane.b32.xlu0 %v231, 32
    %v240 = vpop.permute.xlu0 %239
    %vm241 = vcmask 261120
    %v242 = vsel %vm241, %v240, 0
    %244 = vmatprep.subr.mxu0 0.0
    %245 = vmatpush1.msra.mxu0 %v110
    %246 = vmatprep.subr.mxu0 0.0
    %247 = vmatpush1.msra.mxu0 %v111
    %248 = vmatprep.subr.mxu0 0.0
    %249 = vmatpush1.msra.mxu0 %v112
    %250 = vmatprep.subr.mxu0 0.0
    %251 = vmatpush1.msra.mxu0 %v113
    %252 = vmatprep.subr.mxu0 0.0
    %253 = vmatpush1.msra.mxu0 0.0
    %254 = vmatprep.subr.mxu0 0.0
    %255 = vmatpush1.msra.mxu0 0.0
    %256 = vmatprep.subr.mxu0 0.0
    %257 = vmatpush1.msra.mxu0 0.0
    %258 = vmatprep.subr.mxu0 0.0
    %259 = vmatpush1.msra.mxu0 0.0
    %260 = vmatprep.subr.mxu0 0.0
    %261 = vmatpush1.msra.mxu0 0.0
    %262 = vmatprep.subr.mxu0 0.0
    %263 = vmatpush1.msra.mxu0 0.0
    %264 = vmatprep.subr.mxu0 0.0
    %265 = vmatpush1.msra.mxu0 0.0
    %266 = vmatprep.subr.mxu0 0.0
    %267 = vmatpush1.msra.mxu0 0.0
    %268 = vmatprep.subr.mxu0 0.0
    %269 = vmatpush1.msra.mxu0 0.0
    %270 = vmatprep.subr.mxu0 0.0
    %271 = vmatpush1.msra.mxu0 0.0
    %272 = vmatprep.subr.mxu0 0.0
    %273 = vmatpush1.msra.mxu0 0.0
    %274 = vmatprep.subr.mxu0 0.0
    %275 = vmatpush1.msra.mxu0 0.0
    %276 = vmatprep.subr.mxu0 0.0
    %277 = vmatpush1.msra.mxu0 0.0
    %278 = vmatprep.subr.mxu0 0.0
    %279 = vmatpush1.msra.mxu0 0.0
    %280 = vmatprep.subr.mxu0 0.0
    %281 = vmatpush1.msra.mxu0 0.0
    %282 = vmatprep.subr.mxu0 0.0
    %283 = vmatpush1.msra.mxu0 0.0
    %284 = vmatprep.subr.mxu0 0.0
    %285 = vmatpush1.msra.mxu0 0.0
    %286 = vmatprep.subr.mxu0 0.0
    %287 = vmatpush1.msra.mxu0 0.0
    %288 = vmatprep.subr.mxu0 0.0
    %289 = vmatpush1.msra.mxu0 0.0
    %290 = vmatprep.subr.mxu0 0.0
    %291 = vmatpush1.msra.mxu0 0.0
    %292 = vmatprep.subr.mxu0 0.0
    %293 = vmatpush1.msra.mxu0 0.0
    %294 = vmatprep.subr.mxu0 0.0
    %295 = vmatpush1.msra.mxu0 0.0
    %296 = vmatprep.subr.mxu0 0.0
    %297 = vmatpush1.msra.mxu0 0.0
    %298 = vmatprep.subr.mxu0 0.0
    %299 = vmatpush1.msra.mxu0 0.0
    %300 = vmatprep.subr.mxu0 0.0
    %301 = vmatpush1.msra.mxu0 0.0
    %302 = vmatprep.subr.mxu0 0.0
    %303 = vmatpush1.msra.mxu0 0.0
    %304 = vmatprep.subr.mxu0 0.0
    %305 = vmatpush1.msra.mxu0 0.0
    %306 = vmatprep.subr.mxu0 0.0
    %307 = vmatpush1.msra.mxu0 0.0
    %308 = vmatprep.mubr.f32.mxu0 0.0
    %309 = vmatmul.mubr.f32.gmra.mrb[0].mxu0 %v242
    %v310 = vpop.f32.mrb[0].mxu0
    %v311 = vadd.f32 %v236, %v310
    %v312 = vpop.f32.mrb[0].mxu0
    %313 = vdwg.mxu0
    %v314 = vxor.u32 %v311, 2147483648
    %v315 = vmul.f32 %v314, 1.442695
    %v316 = vpow.pop %v315
    %v317 = vadd.f32 %v316, 1.0
    %v318 = vrcp.pop %v317
    %v319 = vmul.f32 1.0, %v318
    %v320 = vtanh.pop %v311
    %322 = vrot.lane.b32.xlu0 %v320, 64
    %v323 = vpop.permute.xlu0 %322
    %v325 = vmul.f32 %v319, %v323
    %v326 = vtanh.pop %v325
    %328 = vrot.lane.b32.xlu0 %v326, 96
    %v329 = vpop.permute.xlu0 %328
    %v331 = vmul.f32 %v319, %v329
    %332 = vmatprep.subr.mxu0 0.0
    %333 = vmatpush1.msra.mxu0 %v114
    %334 = vmatprep.subr.mxu0 0.0
    %335 = vmatpush1.msra.mxu0 %v115
    %336 = vmatprep.subr.mxu0 0.0
    %337 = vmatpush1.msra.mxu0 %v116
    %338 = vmatprep.subr.mxu0 0.0
    %339 = vmatpush1.msra.mxu0 %v117
    %340 = vmatprep.subr.mxu0 0.0
    %341 = vmatpush1.msra.mxu0 0.0
    %342 = vmatprep.subr.mxu0 0.0
    %343 = vmatpush1.msra.mxu0 0.0
    %344 = vmatprep.subr.mxu0 0.0
    %345 = vmatpush1.msra.mxu0 0.0
    %346 = vmatprep.subr.mxu0 0.0
    %347 = vmatpush1.msra.mxu0 0.0
    %348 = vmatprep.subr.mxu0 0.0
    %349 = vmatpush1.msra.mxu0 0.0
    %350 = vmatprep.subr.mxu0 0.0
    %351 = vmatpush1.msra.mxu0 0.0
    %352 = vmatprep.subr.mxu0 0.0
    %353 = vmatpush1.msra.mxu0 0.0
    %354 = vmatprep.subr.mxu0 0.0
    %355 = vmatpush1.msra.mxu0 0.0
    %356 = vmatprep.subr.mxu0 0.0
    %357 = vmatpush1.msra.mxu0 0.0
    %358 = vmatprep.subr.mxu0 0.0
    %359 = vmatpush1.msra.mxu0 0.0
    %360 = vmatprep.subr.mxu0 0.0
    %361 = vmatpush1.msra.mxu0 0.0
    %362 = vmatprep.subr.mxu0 0.0
    %363 = vmatpush1.msra.mxu0 0.0
    %364 = vmatprep.subr.mxu0 0.0
    %365 = vmatpush1.msra.mxu0 0.0
    %366 = vmatprep.subr.mxu0 0.0
    %367 = vmatpush1.msra.mxu0 0.0
    %368 = vmatprep.subr.mxu0 0.0
    %369 = vmatpush1.msra.mxu0 0.0
    %370 = vmatprep.subr.mxu0 0.0
    %371 = vmatpush1.msra.mxu0 0.0
    %372 = vmatprep.subr.mxu0 0.0
    %373 = vmatpush1.msra.mxu0 0.0
    %374 = vmatprep.subr.mxu0 0.0
    %375 = vmatpush1.msra.mxu0 0.0
    %376 = vmatprep.subr.mxu0 0.0
    %377 = vmatpush1.msra.mxu0 0.0
    %378 = vmatprep.subr.mxu0 0.0
    %379 = vmatpush1.msra.mxu0 0.0
    %380 = vmatprep.subr.mxu0 0.0
    %381 = vmatpush1.msra.mxu0 0.0
    %382 = vmatprep.subr.mxu0 0.0
    %383 = vmatpush1.msra.mxu0 0.0
    %384 = vmatprep.subr.mxu0 0.0
    %385 = vmatpush1.msra.mxu0 0.0
    %386 = vmatprep.subr.mxu0 0.0
    %387 = vmatpush1.msra.mxu0 0.0
    %388 = vmatprep.subr.mxu0 0.0
    %389 = vmatpush1.msra.mxu0 0.0
    %390 = vmatprep.subr.mxu0 0.0
    %391 = vmatpush1.msra.mxu0 0.0
    %392 = vmatprep.subr.mxu0 0.0
    %393 = vmatpush1.msra.mxu0 0.0
    %394 = vmatprep.subr.mxu0 0.0
    %395 = vmatpush1.msra.mxu0 0.0
    %396 = vmatprep.mubr.f32.mxu0 0.0
    %397 = vmatmul.mubr.f32.gmra.mrb[0].mxu0 %v242
    %v398 = vpop.f32.mrb[0].mxu0
    %v399 = vadd.f32 0.0, %v398
    %v400 = vpop.f32.mrb[0].mxu0
    %401 = vdwg.mxu0
    %v403 = vrot.slane %v399, 6
    %v405 = vadd.f32 %v206, %v403
    %v406 = vxor.u32 %v405, 2147483648
    %v407 = vmul.f32 %v406, 1.442695
    %v408 = vpow.pop %v407
    %v409 = vadd.f32 %v408, 1.0
    %v410 = vrcp.pop %v409
    %v411 = vmul.f32 1.0, %v410
    %v412 = vtanh.pop %v405
    %v414 = vrot.slane %v225, 6
    %415 = vrot.lane.b32.xlu0 %v414, 32
    %v416 = vpop.permute.xlu0 %415
    %v418 = vmul.f32 %v411, %v416
    %420 = vrot.lane.b32.xlu0 %v412, 64
    %v421 = vpop.permute.xlu0 %420
    %v423 = vmul.f32 %v411, %v421
    %425 = vrot.lane.b32.xlu0 %v423, 32
    %v426 = vpop.permute.xlu0 %425
    %v428 = vadd.f32 %v418, %v426
    %v429 = vtanh.pop %v428
    %431 = vrot.lane.b32.xlu0 %v429, 64
    %v432 = vpop.permute.xlu0 %431
    %v434 = vmul.f32 %v411, %v432
    %v436 = vrot.slane %v434, 2
    %437 = vrot.lane.b32.xlu0 %v436, 32
    %v438 = vpop.permute.xlu0 %437
    %v439 = vsel %vm241, %v438, 0
    %441 = vmatprep.subr.mxu0 0.0
    %442 = vmatpush1.msra.mxu0 %v110
    %443 = vmatprep.subr.mxu0 0.0
    %444 = vmatpush1.msra.mxu0 %v111
    %445 = vmatprep.subr.mxu0 0.0
    %446 = vmatpush1.msra.mxu0 %v112
    %447 = vmatprep.subr.mxu0 0.0
    %448 = vmatpush1.msra.mxu0 %v113
    %449 = vmatprep.subr.mxu0 0.0
    %450 = vmatpush1.msra.mxu0 0.0
    %451 = vmatprep.subr.mxu0 0.0
    %452 = vmatpush1.msra.mxu0 0.0
    %453 = vmatprep.subr.mxu0 0.0
    %454 = vmatpush1.msra.mxu0 0.0
    %455 = vmatprep.subr.mxu0 0.0
    %456 = vmatpush1.msra.mxu0 0.0
    %457 = vmatprep.subr.mxu0 0.0
    %458 = vmatpush1.msra.mxu0 0.0
    %459 = vmatprep.subr.mxu0 0.0
    %460 = vmatpush1.msra.mxu0 0.0
    %461 = vmatprep.subr.mxu0 0.0
    %462 = vmatpush1.msra.mxu0 0.0
    %463 = vmatprep.subr.mxu0 0.0
    %464 = vmatpush1.msra.mxu0 0.0
    %465 = vmatprep.subr.mxu0 0.0
    %466 = vmatpush1.msra.mxu0 0.0
    %467 = vmatprep.subr.mxu0 0.0
    %468 = vmatpush1.msra.mxu0 0.0
    %469 = vmatprep.subr.mxu0 0.0
    %470 = vmatpush1.msra.mxu0 0.0
    %471 = vmatprep.subr.mxu0 0.0
    %472 = vmatpush1.msra.mxu0 0.0
    %473 = vmatprep.subr.mxu0 0.0
    %474 = vmatpush1.msra.mxu0 0.0
    %475 = vmatprep.subr.mxu0 0.0
    %476 = vmatpush1.msra.mxu0 0.0
    %477 = vmatprep.subr.mxu0 0.0
    %478 = vmatpush1.msra.mxu0 0.0
    %479 = vmatprep.subr.mxu0 0.0
    %480 = vmatpush1.msra.mxu0 0.0
    %481 = vmatprep.subr.mxu0 0.0
    %482 = vmatpush1.msra.mxu0 0.0
    %483 = vmatprep.subr.mxu0 0.0
    %484 = vmatpush1.msra.mxu0 0.0
    %485 = vmatprep.subr.mxu0 0.0
    %486 = vmatpush1.msra.mxu0 0.0
    %487 = vmatprep.subr.mxu0 0.0
    %488 = vmatpush1.msra.mxu0 0.0
    %489 = vmatprep.subr.mxu0 0.0
    %490 = vmatpush1.msra.mxu0 0.0
    %491 = vmatprep.subr.mxu0 0.0
    %492 = vmatpush1.msra.mxu0 0.0
    %493 = vmatprep.subr.mxu0 0.0
    %494 = vmatpush1.msra.mxu0 0.0
    %495 = vmatprep.subr.mxu0 0.0
    %496 = vmatpush1.msra.mxu0 0.0
    %497 = vmatprep.subr.mxu0 0.0
    %498 = vmatpush1.msra.mxu0 0.0
    %499 = vmatprep.subr.mxu0 0.0
    %500 = vmatpush1.msra.mxu0 0.0
    %501 = vmatprep.subr.mxu0 0.0
    %502 = vmatpush1.msra.mxu0 0.0
    %503 = vmatprep.subr.mxu0 0.0
    %504 = vmatpush1.msra.mxu0 0.0
    %505 = vmatprep.mubr.f32.mxu0 0.0
    %506 = vmatmul.mubr.f32.gmra.mrb[0].mxu0 %v439
    %v507 = vpop.f32.mrb[0].mxu0
    %v508 = vadd.f32 %v236, %v507
    %v509 = vpop.f32.mrb[0].mxu0
    %510 = vdwg.mxu0
    %512 = vrot.lane.b32.xlu0 %v331, 32
    %v513 = vpop.permute.xlu0 %512
    %v514 = vsel %vm241, %v513, 0
    %516 = vmatprep.subr.mxu0 0.0
    %517 = vmatpush1.msra.mxu0 %v118
    %518 = vmatprep.subr.mxu0 0.0
    %519 = vmatpush1.msra.mxu0 %v119
    %520 = vmatprep.subr.mxu0 0.0
    %521 = vmatpush1.msra.mxu0 %v120
    %522 = vmatprep.subr.mxu0 0.0
    %523 = vmatpush1.msra.mxu0 %v121
    %524 = vmatprep.subr.mxu0 0.0
    %525 = vmatpush1.msra.mxu0 0.0
    %526 = vmatprep.subr.mxu0 0.0
    %527 = vmatpush1.msra.mxu0 0.0
    %528 = vmatprep.subr.mxu0 0.0
    %529 = vmatpush1.msra.mxu0 0.0
    %530 = vmatprep.subr.mxu0 0.0
    %531 = vmatpush1.msra.mxu0 0.0
    %532 = vmatprep.subr.mxu0 0.0
    %533 = vmatpush1.msra.mxu0 0.0
    %534 = vmatprep.subr.mxu0 0.0
    %535 = vmatpush1.msra.mxu0 0.0
    %536 = vmatprep.subr.mxu0 0.0
    %537 = vmatpush1.msra.mxu0 0.0
    %538 = vmatprep.subr.mxu0 0.0
    %539 = vmatpush1.msra.mxu0 0.0
    %540 = vmatprep.subr.mxu0 0.0
    %541 = vmatpush1.msra.mxu0 0.0
    %542 = vmatprep.subr.mxu0 0.0
    %543 = vmatpush1.msra.mxu0 0.0
    %544 = vmatprep.subr.mxu0 0.0
    %545 = vmatpush1.msra.mxu0 0.0
    %546 = vmatprep.subr.mxu0 0.0
    %547 = vmatpush1.msra.mxu0 0.0
    %548 = vmatprep.subr.mxu0 0.0
    %549 = vmatpush1.msra.mxu0 0.0
    %550 = vmatprep.subr.mxu0 0.0
    %551 = vmatpush1.msra.mxu0 0.0
    %552 = vmatprep.subr.mxu0 0.0
    %553 = vmatpush1.msra.mxu0 0.0
    %554 = vmatprep.subr.mxu0 0.0
    %555 = vmatpush1.msra.mxu0 0.0
    %556 = vmatprep.subr.mxu0 0.0
    %557 = vmatpush1.msra.mxu0 0.0
    %558 = vmatprep.subr.mxu0 0.0
    %559 = vmatpush1.msra.mxu0 0.0
    %560 = vmatprep.subr.mxu0 0.0
    %561 = vmatpush1.msra.mxu0 0.0
    %562 = vmatprep.subr.mxu0 0.0
    %563 = vmatpush1.msra.mxu0 0.0
    %564 = vmatprep.subr.mxu0 0.0
    %565 = vmatpush1.msra.mxu0 0.0
    %566 = vmatprep.subr.mxu0 0.0
    %567 = vmatpush1.msra.mxu0 0.0
    %568 = vmatprep.subr.mxu0 0.0
    %569 = vmatpush1.msra.mxu0 0.0
    %570 = vmatprep.subr.mxu0 0.0
    %571 = vmatpush1.msra.mxu0 0.0
    %572 = vmatprep.subr.mxu0 0.0
    %573 = vmatpush1.msra.mxu0 0.0
    %574 = vmatprep.subr.mxu0 0.0
    %575 = vmatpush1.msra.mxu0 0.0
    %576 = vmatprep.subr.mxu0 0.0
    %577 = vmatpush1.msra.mxu0 0.0
    %578 = vmatprep.subr.mxu0 0.0
    %579 = vmatpush1.msra.mxu0 0.0
    %580 = vmatprep.mubr.f32.mxu0 0.0
    %581 = vmatmul.mubr.f32.gmra.mrb[0].mxu0 %v514
    %v582 = vpop.f32.mrb[0].mxu0
    %v583 = vadd.f32 0.0, %v582
    %v584 = vpop.f32.mrb[0].mxu0
    %585 = vdwg.mxu0
    %v586 = vadd.f32 %v508, %v583
    %v587 = vxor.u32 %v586, 2147483648
    %v588 = vmul.f32 %v587, 1.442695
    %v589 = vpow.pop %v588
    %v590 = vadd.f32 %v589, 1.0
    %v591 = vrcp.pop %v590
    %v592 = vmul.f32 1.0, %v591
    %v593 = vtanh.pop %v586
    %595 = vrot.lane.b32.xlu0 %v325, 32
    %v596 = vpop.permute.xlu0 %595
    %v598 = vmul.f32 %v592, %v596
    %600 = vrot.lane.b32.xlu0 %v593, 64
    %v601 = vpop.permute.xlu0 %600
    %v603 = vmul.f32 %v592, %v601
    %605 = vrot.lane.b32.xlu0 %v603, 32
    %v606 = vpop.permute.xlu0 %605
    %v608 = vadd.f32 %v598, %v606
    %v609 = vtanh.pop %v608
    %611 = vrot.lane.b32.xlu0 %v609, 64
    %v612 = vpop.permute.xlu0 %611
    %v614 = vmul.f32 %v592, %v612
    %615 = vmatprep.subr.mxu0 0.0
    %616 = vmatpush1.msra.mxu0 %v114
    %617 = vmatprep.subr.mxu0 0.0
    %618 = vmatpush1.msra.mxu0 %v115
    %619 = vmatprep.subr.mxu0 0.0
    %620 = vmatpush1.msra.mxu0 %v116
    %621 = vmatprep.subr.mxu0 0.0
    %622 = vmatpush1.msra.mxu0 %v117
    %623 = vmatprep.subr.mxu0 0.0
    %624 = vmatpush1.msra.mxu0 0.0
    %625 = vmatprep.subr.mxu0 0.0
    %626 = vmatpush1.msra.mxu0 0.0
    %627 = vmatprep.subr.mxu0 0.0
    %628 = vmatpush1.msra.mxu0 0.0
    %629 = vmatprep.subr.mxu0 0.0
    %630 = vmatpush1.msra.mxu0 0.0
    %631 = vmatprep.subr.mxu0 0.0
    %632 = vmatpush1.msra.mxu0 0.0
    %633 = vmatprep.subr.mxu0 0.0
    %634 = vmatpush1.msra.mxu0 0.0
    %635 = vmatprep.subr.mxu0 0.0
    %636 = vmatpush1.msra.mxu0 0.0
    %637 = vmatprep.subr.mxu0 0.0
    %638 = vmatpush1.msra.mxu0 0.0
    %639 = vmatprep.subr.mxu0 0.0
    %640 = vmatpush1.msra.mxu0 0.0
    %641 = vmatprep.subr.mxu0 0.0
    %642 = vmatpush1.msra.mxu0 0.0
    %643 = vmatprep.subr.mxu0 0.0
    %644 = vmatpush1.msra.mxu0 0.0
    %645 = vmatprep.subr.mxu0 0.0
    %646 = vmatpush1.msra.mxu0 0.0
    %647 = vmatprep.subr.mxu0 0.0
    %648 = vmatpush1.msra.mxu0 0.0
    %649 = vmatprep.subr.mxu0 0.0
    %650 = vmatpush1.msra.mxu0 0.0
    %651 = vmatprep.subr.mxu0 0.0
    %652 = vmatpush1.msra.mxu0 0.0
    %653 = vmatprep.subr.mxu0 0.0
    %654 = vmatpush1.msra.mxu0 0.0
    %655 = vmatprep.subr.mxu0 0.0
    %656 = vmatpush1.msra.mxu0 0.0
    %657 = vmatprep.subr.mxu0 0.0
    %658 = vmatpush1.msra.mxu0 0.0
    %659 = vmatprep.subr.mxu0 0.0
    %660 = vmatpush1.msra.mxu0 0.0
    %661 = vmatprep.subr.mxu0 0.0
    %662 = vmatpush1.msra.mxu0 0.0
    %663 = vmatprep.subr.mxu0 0.0
    %664 = vmatpush1.msra.mxu0 0.0
    %665 = vmatprep.subr.mxu0 0.0
    %666 = vmatpush1.msra.mxu0 0.0
    %667 = vmatprep.subr.mxu0 0.0
    %668 = vmatpush1.msra.mxu0 0.0
    %669 = vmatprep.subr.mxu0 0.0
    %670 = vmatpush1.msra.mxu0 0.0
    %671 = vmatprep.subr.mxu0 0.0
    %672 = vmatpush1.msra.mxu0 0.0
    %673 = vmatprep.subr.mxu0 0.0
    %674 = vmatpush1.msra.mxu0 0.0
    %675 = vmatprep.subr.mxu0 0.0
    %676 = vmatpush1.msra.mxu0 0.0
    %677 = vmatprep.subr.mxu0 0.0
    %678 = vmatpush1.msra.mxu0 0.0
    %679 = vmatprep.mubr.f32.mxu0 0.0
    %680 = vmatmul.mubr.f32.gmra.mrb[0].mxu0 %v439
    %v681 = vpop.f32.mrb[0].mxu0
    %v682 = vadd.f32 0.0, %v681
    %v683 = vpop.f32.mrb[0].mxu0
    %684 = vdwg.mxu0
    %v686 = vrot.slane %v682, 4
    %v688 = vadd.f32 %v206, %v686
    %v689 = vxor.u32 %v688, 2147483648
    %v690 = vmul.f32 %v689, 1.442695
    %v691 = vpow.pop %v690
    %v692 = vadd.f32 %v691, 1.0
    %v693 = vrcp.pop %v692
    %v694 = vmul.f32 1.0, %v693
    %v695 = vtanh.pop %v688
    %v697 = vrot.slane %v428, 6
    %v699 = vmul.f32 %v694, %v697
    %701 = vrot.lane.b32.xlu0 %v695, 64
    %v702 = vpop.permute.xlu0 %701
    %v704 = vmul.f32 %v694, %v702
    %706 = vrot.lane.b32.xlu0 %v704, 32
    %v707 = vpop.permute.xlu0 %706
    %v709 = vadd.f32 %v699, %v707
    %v710 = vtanh.pop %v709
    %712 = vrot.lane.b32.xlu0 %v710, 64
    %v713 = vpop.permute.xlu0 %712
    %v715 = vmul.f32 %v694, %v713
    %v717 = vrot.slane %v715, 4
    %718 = vrot.lane.b32.xlu0 %v717, 32
    %v719 = vpop.permute.xlu0 %718
    %v720 = vsel %vm241, %v719, 0
    %722 = vmatprep.subr.mxu0 0.0
    %723 = vmatpush1.msra.mxu0 %v110
    %724 = vmatprep.subr.mxu0 0.0
    %725 = vmatpush1.msra.mxu0 %v111
    %726 = vmatprep.subr.mxu0 0.0
    %727 = vmatpush1.msra.mxu0 %v112
    %728 = vmatprep.subr.mxu0 0.0
    %729 = vmatpush1.msra.mxu0 %v113
    %730 = vmatprep.subr.mxu0 0.0
    %731 = vmatpush1.msra.mxu0 0.0
    %732 = vmatprep.subr.mxu0 0.0
    %733 = vmatpush1.msra.mxu0 0.0
    %734 = vmatprep.subr.mxu0 0.0
    %735 = vmatpush1.msra.mxu0 0.0
    %736 = vmatprep.subr.mxu0 0.0
    %737 = vmatpush1.msra.mxu0 0.0
    %738 = vmatprep.subr.mxu0 0.0
    %739 = vmatpush1.msra.mxu0 0.0
    %740 = vmatprep.subr.mxu0 0.0
    %741 = vmatpush1.msra.mxu0 0.0
    %742 = vmatprep.subr.mxu0 0.0
    %743 = vmatpush1.msra.mxu0 0.0
    %744 = vmatprep.subr.mxu0 0.0
    %745 = vmatpush1.msra.mxu0 0.0
    %746 = vmatprep.subr.mxu0 0.0
    %747 = vmatpush1.msra.mxu0 0.0
    %748 = vmatprep.subr.mxu0 0.0
    %749 = vmatpush1.msra.mxu0 0.0
    %750 = vmatprep.subr.mxu0 0.0
    %751 = vmatpush1.msra.mxu0 0.0
    %752 = vmatprep.subr.mxu0 0.0
    %753 = vmatpush1.msra.mxu0 0.0
    %754 = vmatprep.subr.mxu0 0.0
    %755 = vmatpush1.msra.mxu0 0.0
    %756 = vmatprep.subr.mxu0 0.0
    %757 = vmatpush1.msra.mxu0 0.0
    %758 = vmatprep.subr.mxu0 0.0
    %759 = vmatpush1.msra.mxu0 0.0
    %760 = vmatprep.subr.mxu0 0.0
    %761 = vmatpush1.msra.mxu0 0.0
    %762 = vmatprep.subr.mxu0 0.0
    %763 = vmatpush1.msra.mxu0 0.0
    %764 = vmatprep.subr.mxu0 0.0
    %765 = vmatpush1.msra.mxu0 0.0
    %766 = vmatprep.subr.mxu0 0.0
    %767 = vmatpush1.msra.mxu0 0.0
    %768 = vmatprep.subr.mxu0 0.0
    %769 = vmatpush1.msra.mxu0 0.0
    %770 = vmatprep.subr.mxu0 0.0
    %771 = vmatpush1.msra.mxu0 0.0
    %772 = vmatprep.subr.mxu0 0.0
    %773 = vmatpush1.msra.mxu0 0.0
    %774 = vmatprep.subr.mxu0 0.0
    %775 = vmatpush1.msra.mxu0 0.0
    %776 = vmatprep.subr.mxu0 0.0
    %777 = vmatpush1.msra.mxu0 0.0
    %778 = vmatprep.subr.mxu0 0.0
    %779 = vmatpush1.msra.mxu0 0.0
    %780 = vmatprep.subr.mxu0 0.0
    %781 = vmatpush1.msra.mxu0 0.0
    %782 = vmatprep.subr.mxu0 0.0
    %783 = vmatpush1.msra.mxu0 0.0
    %784 = vmatprep.subr.mxu0 0.0
    %785 = vmatpush1.msra.mxu0 0.0
    %786 = vmatprep.mubr.f32.mxu0 0.0
    %787 = vmatmul.mubr.f32.gmra.mrb[0].mxu0 %v720
    %v788 = vpop.f32.mrb[0].mxu0
    %v789 = vadd.f32 %v236, %v788
    %v790 = vpop.f32.mrb[0].mxu0
    %791 = vdwg.mxu0
    %793 = vrot.lane.b32.xlu0 %v614, 32
    %v794 = vpop.permute.xlu0 %793
    %v795 = vsel %vm241, %v794, 0
    %797 = vmatprep.subr.mxu0 0.0
    %798 = vmatpush1.msra.mxu0 %v118
    %799 = vmatprep.subr.mxu0 0.0
    %800 = vmatpush1.msra.mxu0 %v119
    %801 = vmatprep.subr.mxu0 0.0
    %802 = vmatpush1.msra.mxu0 %v120
    %803 = vmatprep.subr.mxu0 0.0
    %804 = vmatpush1.msra.mxu0 %v121
    %805 = vmatprep.subr.mxu0 0.0
    %806 = vmatpush1.msra.mxu0 0.0
    %807 = vmatprep.subr.mxu0 0.0
    %808 = vmatpush1.msra.mxu0 0.0
    %809 = vmatprep.subr.mxu0 0.0
    %810 = vmatpush1.msra.mxu0 0.0
    %811 = vmatprep.subr.mxu0 0.0
    %812 = vmatpush1.msra.mxu0 0.0
    %813 = vmatprep.subr.mxu0 0.0
    %814 = vmatpush1.msra.mxu0 0.0
    %815 = vmatprep.subr.mxu0 0.0
    %816 = vmatpush1.msra.mxu0 0.0
    %817 = vmatprep.subr.mxu0 0.0
    %818 = vmatpush1.msra.mxu0 0.0
    %819 = vmatprep.subr.mxu0 0.0
    %820 = vmatpush1.msra.mxu0 0.0
    %821 = vmatprep.subr.mxu0 0.0
    %822 = vmatpush1.msra.mxu0 0.0
    %823 = vmatprep.subr.mxu0 0.0
    %824 = vmatpush1.msra.mxu0 0.0
    %825 = vmatprep.subr.mxu0 0.0
    %826 = vmatpush1.msra.mxu0 0.0
    %827 = vmatprep.subr.mxu0 0.0
    %828 = vmatpush1.msra.mxu0 0.0
    %829 = vmatprep.subr.mxu0 0.0
    %830 = vmatpush1.msra.mxu0 0.0
    %831 = vmatprep.subr.mxu0 0.0
    %832 = vmatpush1.msra.mxu0 0.0
    %833 = vmatprep.subr.mxu0 0.0
    %834 = vmatpush1.msra.mxu0 0.0
    %835 = vmatprep.subr.mxu0 0.0
    %836 = vmatpush1.msra.mxu0 0.0
    %837 = vmatprep.subr.mxu0 0.0
    %838 = vmatpush1.msra.mxu0 0.0
    %839 = vmatprep.subr.mxu0 0.0
    %840 = vmatpush1.msra.mxu0 0.0
    %841 = vmatprep.subr.mxu0 0.0
    %842 = vmatpush1.msra.mxu0 0.0
    %843 = vmatprep.subr.mxu0 0.0
    %844 = vmatpush1.msra.mxu0 0.0
    %845 = vmatprep.subr.mxu0 0.0
    %846 = vmatpush1.msra.mxu0 0.0
    %847 = vmatprep.subr.mxu0 0.0
    %848 = vmatpush1.msra.mxu0 0.0
    %849 = vmatprep.subr.mxu0 0.0
    %850 = vmatpush1.msra.mxu0 0.0
    %851 = vmatprep.subr.mxu0 0.0
    %852 = vmatpush1.msra.mxu0 0.0
    %853 = vmatprep.subr.mxu0 0.0
    %854 = vmatpush1.msra.mxu0 0.0
    %855 = vmatprep.subr.mxu0 0.0
    %856 = vmatpush1.msra.mxu0 0.0
    %857 = vmatprep.subr.mxu0 0.0
    %858 = vmatpush1.msra.mxu0 0.0
    %859 = vmatprep.subr.mxu0 0.0
    %860 = vmatpush1.msra.mxu0 0.0
    %861 = vmatprep.mubr.f32.mxu0 0.0
    %862 = vmatmul.mubr.f32.gmra.mrb[0].mxu0 %v795
    %v863 = vpop.f32.mrb[0].mxu0
    %v864 = vadd.f32 0.0, %v863
    %v865 = vpop.f32.mrb[0].mxu0
    %866 = vdwg.mxu0
    %v867 = vadd.f32 %v789, %v864
    %v868 = vxor.u32 %v867, 2147483648
    %v869 = vmul.f32 %v868, 1.442695
    %v870 = vpow.pop %v869
    %v871 = vadd.f32 %v870, 1.0
    %v872 = vrcp.pop %v871
    %v873 = vmul.f32 1.0, %v872
    %v874 = vtanh.pop %v867
    %v875 = vmul.f32 %v873, %v608
    %877 = vrot.lane.b32.xlu0 %v874, 64
    %v878 = vpop.permute.xlu0 %877
    %v880 = vmul.f32 %v873, %v878
    %882 = vrot.lane.b32.xlu0 %v880, 32
    %v883 = vpop.permute.xlu0 %882
    %v885 = vadd.f32 %v875, %v883
    %v886 = vtanh.pop %v885
    %888 = vrot.lane.b32.xlu0 %v886, 64
    %v889 = vpop.permute.xlu0 %888
    %v891 = vmul.f32 %v873, %v889
    %892 = vmatprep.subr.mxu0 0.0
    %893 = vmatpush1.msra.mxu0 %v114
    %894 = vmatprep.subr.mxu0 0.0
    %895 = vmatpush1.msra.mxu0 %v115
    %896 = vmatprep.subr.mxu0 0.0
    %897 = vmatpush1.msra.mxu0 %v116
    %898 = vmatprep.subr.mxu0 0.0
    %899 = vmatpush1.msra.mxu0 %v117
    %900 = vmatprep.subr.mxu0 0.0
    %901 = vmatpush1.msra.mxu0 0.0
    %902 = vmatprep.subr.mxu0 0.0
    %903 = vmatpush1.msra.mxu0 0.0
    %904 = vmatprep.subr.mxu0 0.0
    %905 = vmatpush1.msra.mxu0 0.0
    %906 = vmatprep.subr.mxu0 0.0
    %907 = vmatpush1.msra.mxu0 0.0
    %908 = vmatprep.subr.mxu0 0.0
    %909 = vmatpush1.msra.mxu0 0.0
    %910 = vmatprep.subr.mxu0 0.0
    %911 = vmatpush1.msra.mxu0 0.0
    %912 = vmatprep.subr.mxu0 0.0
    %913 = vmatpush1.msra.mxu0 0.0
    %914 = vmatprep.subr.mxu0 0.0
    %915 = vmatpush1.msra.mxu0 0.0
    %916 = vmatprep.subr.mxu0 0.0
    %917 = vmatpush1.msra.mxu0 0.0
    %918 = vmatprep.subr.mxu0 0.0
    %919 = vmatpush1.msra.mxu0 0.0
    %920 = vmatprep.subr.mxu0 0.0
    %921 = vmatpush1.msra.mxu0 0.0
    %922 = vmatprep.subr.mxu0 0.0
    %923 = vmatpush1.msra.mxu0 0.0
    %924 = vmatprep.subr.mxu0 0.0
    %925 = vmatpush1.msra.mxu0 0.0
    %926 = vmatprep.subr.mxu0 0.0
    %927 = vmatpush1.msra.mxu0 0.0
    %928 = vmatprep.subr.mxu0 0.0
    %929 = vmatpush1.msra.mxu0 0.0
    %930 = vmatprep.subr.mxu0 0.0
    %931 = vmatpush1.msra.mxu0 0.0
    %932 = vmatprep.subr.mxu0 0.0
    %933 = vmatpush1.msra.mxu0 0.0
    %934 = vmatprep.subr.mxu0 0.0
    %935 = vmatpush1.msra.mxu0 0.0
    %936 = vmatprep.subr.mxu0 0.0
    %937 = vmatpush1.msra.mxu0 0.0
    %938 = vmatprep.subr.mxu0 0.0
    %939 = vmatpush1.msra.mxu0 0.0
    %940 = vmatprep.subr.mxu0 0.0
    %941 = vmatpush1.msra.mxu0 0.0
    %942 = vmatprep.subr.mxu0 0.0
    %943 = vmatpush1.msra.mxu0 0.0
    %944 = vmatprep.subr.mxu0 0.0
    %945 = vmatpush1.msra.mxu0 0.0
    %946 = vmatprep.subr.mxu0 0.0
    %947 = vmatpush1.msra.mxu0 0.0
    %948 = vmatprep.subr.mxu0 0.0
    %949 = vmatpush1.msra.mxu0 0.0
    %950 = vmatprep.subr.mxu0 0.0
    %951 = vmatpush1.msra.mxu0 0.0
    %952 = vmatprep.subr.mxu0 0.0
    %953 = vmatpush1.msra.mxu0 0.0
    %954 = vmatprep.subr.mxu0 0.0
    %955 = vmatpush1.msra.mxu0 0.0
    %956 = vmatprep.mubr.f32.mxu0 0.0
    %957 = vmatmul.mubr.f32.gmra.mrb[0].mxu0 %v720
    %v958 = vpop.f32.mrb[0].mxu0
    %v959 = vadd.f32 0.0, %v958
    %v960 = vpop.f32.mrb[0].mxu0
    %961 = vdwg.mxu0
    %v963 = vrot.slane %v959, 2
    %v965 = vadd.f32 %v206, %v963
    %v966 = vxor.u32 %v965, 2147483648
    %v967 = vmul.f32 %v966, 1.442695
    %v968 = vpow.pop %v967
    %v969 = vadd.f32 %v968, 1.0
    %v970 = vrcp.pop %v969
    %v971 = vmul.f32 1.0, %v970
    %v972 = vtanh.pop %v965
    %v974 = vrot.slane %v709, 6
    %v976 = vmul.f32 %v971, %v974
    %978 = vrot.lane.b32.xlu0 %v972, 64
    %v979 = vpop.permute.xlu0 %978
    %v981 = vmul.f32 %v971, %v979
    %983 = vrot.lane.b32.xlu0 %v981, 32
    %v984 = vpop.permute.xlu0 %983
    %v986 = vadd.f32 %v976, %v984
    %v987 = vtanh.pop %v986
    %989 = vrot.lane.b32.xlu0 %v987, 64
    %v990 = vpop.permute.xlu0 %989
    %v992 = vmul.f32 %v971, %v990
    %v994 = vrot.slane %v992, 6
    %995 = vrot.lane.b32.xlu0 %v994, 32
    %v996 = vpop.permute.xlu0 %995
    %v997 = vsel %vm241, %v996, 0
    %999 = vmatprep.subr.mxu0 0.0
    %1000 = vmatpush1.msra.mxu0 %v110
    %1001 = vmatprep.subr.mxu0 0.0
    %1002 = vmatpush1.msra.mxu0 %v111
    %1003 = vmatprep.subr.mxu0 0.0
    %1004 = vmatpush1.msra.mxu0 %v112
    %1005 = vmatprep.subr.mxu0 0.0
    %1006 = vmatpush1.msra.mxu0 %v113
    %1007 = vmatprep.subr.mxu0 0.0
    %1008 = vmatpush1.msra.mxu0 0.0
    %1009 = vmatprep.subr.mxu0 0.0
    %1010 = vmatpush1.msra.mxu0 0.0
    %1011 = vmatprep.subr.mxu0 0.0
    %1012 = vmatpush1.msra.mxu0 0.0
    %1013 = vmatprep.subr.mxu0 0.0
    %1014 = vmatpush1.msra.mxu0 0.0
    %1015 = vmatprep.subr.mxu0 0.0
    %1016 = vmatpush1.msra.mxu0 0.0
    %1017 = vmatprep.subr.mxu0 0.0
    %1018 = vmatpush1.msra.mxu0 0.0
    %1019 = vmatprep.subr.mxu0 0.0
    %1020 = vmatpush1.msra.mxu0 0.0
    %1021 = vmatprep.subr.mxu0 0.0
    %1022 = vmatpush1.msra.mxu0 0.0
    %1023 = vmatprep.subr.mxu0 0.0
    %1024 = vmatpush1.msra.mxu0 0.0
    %1025 = vmatprep.subr.mxu0 0.0
    %1026 = vmatpush1.msra.mxu0 0.0
    %1027 = vmatprep.subr.mxu0 0.0
    %1028 = vmatpush1.msra.mxu0 0.0
    %1029 = vmatprep.subr.mxu0 0.0
    %1030 = vmatpush1.msra.mxu0 0.0
    %1031 = vmatprep.subr.mxu0 0.0
    %1032 = vmatpush1.msra.mxu0 0.0
    %1033 = vmatprep.subr.mxu0 0.0
    %1034 = vmatpush1.msra.mxu0 0.0
    %1035 = vmatprep.subr.mxu0 0.0
    %1036 = vmatpush1.msra.mxu0 0.0
    %1037 = vmatprep.subr.mxu0 0.0
    %1038 = vmatpush1.msra.mxu0 0.0
    %1039 = vmatprep.subr.mxu0 0.0
    %1040 = vmatpush1.msra.mxu0 0.0
    %1041 = vmatprep.subr.mxu0 0.0
    %1042 = vmatpush1.msra.mxu0 0.0
    %1043 = vmatprep.subr.mxu0 0.0
    %1044 = vmatpush1.msra.mxu0 0.0
    %1045 = vmatprep.subr.mxu0 0.0
    %1046 = vmatpush1.msra.mxu0 0.0
    %1047 = vmatprep.subr.mxu0 0.0
    %1048 = vmatpush1.msra.mxu0 0.0
    %1049 = vmatprep.subr.mxu0 0.0
    %1050 = vmatpush1.msra.mxu0 0.0
    %1051 = vmatprep.subr.mxu0 0.0
    %1052 = vmatpush1.msra.mxu0 0.0
    %1053 = vmatprep.subr.mxu0 0.0
    %1054 = vmatpush1.msra.mxu0 0.0
    %1055 = vmatprep.subr.mxu0 0.0
    %1056 = vmatpush1.msra.mxu0 0.0
    %1057 = vmatprep.subr.mxu0 0.0
    %1058 = vmatpush1.msra.mxu0 0.0
    %1059 = vmatprep.subr.mxu0 0.0
    %1060 = vmatpush1.msra.mxu0 0.0
    %1061 = vmatprep.subr.mxu0 0.0
    %1062 = vmatpush1.msra.mxu0 0.0
    %1063 = vmatprep.mubr.f32.mxu0 0.0
    %1064 = vmatmul.mubr.f32.gmra.mrb[0].mxu0 %v997
    %v1065 = vpop.f32.mrb[0].mxu0
    %v1066 = vadd.f32 %v236, %v1065
    %v1067 = vpop.f32.mrb[0].mxu0
    %1068 = vdwg.mxu0
    %1070 = vrot.lane.b32.xlu0 %v891, 32
    %v1071 = vpop.permute.xlu0 %1070
    %v1072 = vsel %vm241, %v1071, 0
    %1074 = vmatprep.subr.mxu0 0.0
    %1075 = vmatpush1.msra.mxu0 %v118
    %1076 = vmatprep.subr.mxu0 0.0
    %1077 = vmatpush1.msra.mxu0 %v119
    %1078 = vmatprep.subr.mxu0 0.0
    %1079 = vmatpush1.msra.mxu0 %v120
    %1080 = vmatprep.subr.mxu0 0.0
    %1081 = vmatpush1.msra.mxu0 %v121
    %1082 = vmatprep.subr.mxu0 0.0
    %1083 = vmatpush1.msra.mxu0 0.0
    %1084 = vmatprep.subr.mxu0 0.0
    %1085 = vmatpush1.msra.mxu0 0.0
    %1086 = vmatprep.subr.mxu0 0.0
    %1087 = vmatpush1.msra.mxu0 0.0
    %1088 = vmatprep.subr.mxu0 0.0
    %1089 = vmatpush1.msra.mxu0 0.0
    %1090 = vmatprep.subr.mxu0 0.0
    %1091 = vmatpush1.msra.mxu0 0.0
    %1092 = vmatprep.subr.mxu0 0.0
    %1093 = vmatpush1.msra.mxu0 0.0
    %1094 = vmatprep.subr.mxu0 0.0
    %1095 = vmatpush1.msra.mxu0 0.0
    %1096 = vmatprep.subr.mxu0 0.0
    %1097 = vmatpush1.msra.mxu0 0.0
    %1098 = vmatprep.subr.mxu0 0.0
    %1099 = vmatpush1.msra.mxu0 0.0
    %1100 = vmatprep.subr.mxu0 0.0
    %1101 = vmatpush1.msra.mxu0 0.0
    %1102 = vmatprep.subr.mxu0 0.0
    %1103 = vmatpush1.msra.mxu0 0.0
    %1104 = vmatprep.subr.mxu0 0.0
    %1105 = vmatpush1.msra.mxu0 0.0
    %1106 = vmatprep.subr.mxu0 0.0
    %1107 = vmatpush1.msra.mxu0 0.0
    %1108 = vmatprep.subr.mxu0 0.0
    %1109 = vmatpush1.msra.mxu0 0.0
    %1110 = vmatprep.subr.mxu0 0.0
    %1111 = vmatpush1.msra.mxu0 0.0
    %1112 = vmatprep.subr.mxu0 0.0
    %1113 = vmatpush1.msra.mxu0 0.0
    %1114 = vmatprep.subr.mxu0 0.0
    %1115 = vmatpush1.msra.mxu0 0.0
    %1116 = vmatprep.subr.mxu0 0.0
    %1117 = vmatpush1.msra.mxu0 0.0
    %1118 = vmatprep.subr.mxu0 0.0
    %1119 = vmatpush1.msra.mxu0 0.0
    %1120 = vmatprep.subr.mxu0 0.0
    %1121 = vmatpush1.msra.mxu0 0.0
    %1122 = vmatprep.subr.mxu0 0.0
    %1123 = vmatpush1.msra.mxu0 0.0
    %1124 = vmatprep.subr.mxu0 0.0
    %1125 = vmatpush1.msra.mxu0 0.0
    %1126 = vmatprep.subr.mxu0 0.0
    %1127 = vmatpush1.msra.mxu0 0.0
    %1128 = vmatprep.subr.mxu0 0.0
    %1129 = vmatpush1.msra.mxu0 0.0
    %1130 = vmatprep.subr.mxu0 0.0
    %1131 = vmatpush1.msra.mxu0 0.0
    %1132 = vmatprep.subr.mxu0 0.0
    %1133 = vmatpush1.msra.mxu0 0.0
    %1134 = vmatprep.subr.mxu0 0.0
    %1135 = vmatpush1.msra.mxu0 0.0
    %1136 = vmatprep.subr.mxu0 0.0
    %1137 = vmatpush1.msra.mxu0 0.0
    %1138 = vmatprep.mubr.f32.mxu0 0.0
    %1139 = vmatmul.mubr.f32.gmra.mrb[0].mxu0 %v1072
    %v1140 = vpop.f32.mrb[0].mxu0
    %v1141 = vadd.f32 0.0, %v1140
    %v1142 = vpop.f32.mrb[0].mxu0
    %1143 = vdwg.mxu0
    %v1144 = vadd.f32 %v1066, %v1141
    %v1145 = vxor.u32 %v1144, 2147483648
    %v1146 = vmul.f32 %v1145, 1.442695
    %v1147 = vpow.pop %v1146
    %v1148 = vadd.f32 %v1147, 1.0
    %v1149 = vrcp.pop %v1148
    %v1150 = vmul.f32 1.0, %v1149
    %v1151 = vtanh.pop %v1144
    %v1152 = vmul.f32 %v1150, %v885
    %1154 = vrot.lane.b32.xlu0 %v1151, 64
    %v1155 = vpop.permute.xlu0 %1154
    %v1157 = vmul.f32 %v1150, %v1155
    %1159 = vrot.lane.b32.xlu0 %v1157, 32
    %v1160 = vpop.permute.xlu0 %1159
    %v1162 = vadd.f32 %v1152, %v1160
    %v1163 = vtanh.pop %v1162
    %1165 = vrot.lane.b32.xlu0 %v1163, 64
    %v1166 = vpop.permute.xlu0 %1165
    %v1168 = vmul.f32 %v1150, %v1166
    %1169 = vmatprep.subr.mxu0 0.0
    %1170 = vmatpush1.msra.mxu0 %v114
    %1171 = vmatprep.subr.mxu0 0.0
    %1172 = vmatpush1.msra.mxu0 %v115
    %1173 = vmatprep.subr.mxu0 0.0
    %1174 = vmatpush1.msra.mxu0 %v116
    %1175 = vmatprep.subr.mxu0 0.0
    %1176 = vmatpush1.msra.mxu0 %v117
    %1177 = vmatprep.subr.mxu0 0.0
    %1178 = vmatpush1.msra.mxu0 0.0
    %1179 = vmatprep.subr.mxu0 0.0
    %1180 = vmatpush1.msra.mxu0 0.0
    %1181 = vmatprep.subr.mxu0 0.0
    %1182 = vmatpush1.msra.mxu0 0.0
    %1183 = vmatprep.subr.mxu0 0.0
    %1184 = vmatpush1.msra.mxu0 0.0
    %1185 = vmatprep.subr.mxu0 0.0
    %1186 = vmatpush1.msra.mxu0 0.0
    %1187 = vmatprep.subr.mxu0 0.0
    %1188 = vmatpush1.msra.mxu0 0.0
    %1189 = vmatprep.subr.mxu0 0.0
    %1190 = vmatpush1.msra.mxu0 0.0
    %1191 = vmatprep.subr.mxu0 0.0
    %1192 = vmatpush1.msra.mxu0 0.0
    %1193 = vmatprep.subr.mxu0 0.0
    %1194 = vmatpush1.msra.mxu0 0.0
    %1195 = vmatprep.subr.mxu0 0.0
    %1196 = vmatpush1.msra.mxu0 0.0
    %1197 = vmatprep.subr.mxu0 0.0
    %1198 = vmatpush1.msra.mxu0 0.0
    %1199 = vmatprep.subr.mxu0 0.0
    %1200 = vmatpush1.msra.mxu0 0.0
    %1201 = vmatprep.subr.mxu0 0.0
    %1202 = vmatpush1.msra.mxu0 0.0
    %1203 = vmatprep.subr.mxu0 0.0
    %1204 = vmatpush1.msra.mxu0 0.0
    %1205 = vmatprep.subr.mxu0 0.0
    %1206 = vmatpush1.msra.mxu0 0.0
    %1207 = vmatprep.subr.mxu0 0.0
    %1208 = vmatpush1.msra.mxu0 0.0
    %1209 = vmatprep.subr.mxu0 0.0
    %1210 = vmatpush1.msra.mxu0 0.0
    %1211 = vmatprep.subr.mxu0 0.0
    %1212 = vmatpush1.msra.mxu0 0.0
    %1213 = vmatprep.subr.mxu0 0.0
    %1214 = vmatpush1.msra.mxu0 0.0
    %1215 = vmatprep.subr.mxu0 0.0
    %1216 = vmatpush1.msra.mxu0 0.0
    %1217 = vmatprep.subr.mxu0 0.0
    %1218 = vmatpush1.msra.mxu0 0.0
    %1219 = vmatprep.subr.mxu0 0.0
    %1220 = vmatpush1.msra.mxu0 0.0
    %1221 = vmatprep.subr.mxu0 0.0
    %1222 = vmatpush1.msra.mxu0 0.0
    %1223 = vmatprep.subr.mxu0 0.0
    %1224 = vmatpush1.msra.mxu0 0.0
    %1225 = vmatprep.subr.mxu0 0.0
    %1226 = vmatpush1.msra.mxu0 0.0
    %1227 = vmatprep.subr.mxu0 0.0
    %1228 = vmatpush1.msra.mxu0 0.0
    %1229 = vmatprep.subr.mxu0 0.0
    %1230 = vmatpush1.msra.mxu0 0.0
    %1231 = vmatprep.subr.mxu0 0.0
    %1232 = vmatpush1.msra.mxu0 0.0
    %1233 = vmatprep.mubr.f32.mxu0 0.0
    %1234 = vmatmul.mubr.f32.gmra.mrb[0].mxu0 %v997
    %v1235 = vpop.f32.mrb[0].mxu0
    %v1236 = vadd.f32 0.0, %v1235
    %v1237 = vpop.f32.mrb[0].mxu0
    %1238 = vdwg.mxu0
    %v1239 = vadd.f32 %v211, %v1236
    %v1240 = vxor.u32 %v1239, 2147483648
    %v1241 = vmul.f32 %v1240, 1.442695
    %v1242 = vpow.pop %v1241
    %v1243 = vadd.f32 %v1242, 1.0
    %v1244 = vrcp.pop %v1243
    %v1245 = vmul.f32 1.0, %v1244
    %v1246 = vtanh.pop %v1239
    %v1248 = vrot.slane %v986, 6
    %v1250 = vmul.f32 %v1245, %v1248
    %1252 = vrot.lane.b32.xlu0 %v1246, 64
    %v1253 = vpop.permute.xlu0 %1252
    %v1255 = vmul.f32 %v1245, %v1253
    %1257 = vrot.lane.b32.xlu0 %v1255, 32
    %v1258 = vpop.permute.xlu0 %1257
    %v1260 = vadd.f32 %v1250, %v1258
    %v1261 = vtanh.pop %v1260
    %1263 = vrot.lane.b32.xlu0 %v1261, 64
    %v1264 = vpop.permute.xlu0 %1263
    %v1266 = vmul.f32 %v1245, %v1264
    %1268 = vrot.lane.b32.xlu0 %v1266, 32
    %v1269 = vpop.permute.xlu0 %1268
    %v1270 = vsel %vm241, %v1269, 0
    %1272 = vmatprep.subr.mxu0 0.0
    %1273 = vmatpush1.msra.mxu0 %v110
    %1274 = vmatprep.subr.mxu0 0.0
    %1275 = vmatpush1.msra.mxu0 %v111
    %1276 = vmatprep.subr.mxu0 0.0
    %1277 = vmatpush1.msra.mxu0 %v112
    %1278 = vmatprep.subr.mxu0 0.0
    %1279 = vmatpush1.msra.mxu0 %v113
    %1280 = vmatprep.subr.mxu0 0.0
    %1281 = vmatpush1.msra.mxu0 0.0
    %1282 = vmatprep.subr.mxu0 0.0
    %1283 = vmatpush1.msra.mxu0 0.0
    %1284 = vmatprep.subr.mxu0 0.0
    %1285 = vmatpush1.msra.mxu0 0.0
    %1286 = vmatprep.subr.mxu0 0.0
    %1287 = vmatpush1.msra.mxu0 0.0
    %1288 = vmatprep.subr.mxu0 0.0
    %1289 = vmatpush1.msra.mxu0 0.0
    %1290 = vmatprep.subr.mxu0 0.0
    %1291 = vmatpush1.msra.mxu0 0.0
    %1292 = vmatprep.subr.mxu0 0.0
    %1293 = vmatpush1.msra.mxu0 0.0
    %1294 = vmatprep.subr.mxu0 0.0
    %1295 = vmatpush1.msra.mxu0 0.0
    %1296 = vmatprep.subr.mxu0 0.0
    %1297 = vmatpush1.msra.mxu0 0.0
    %1298 = vmatprep.subr.mxu0 0.0
    %1299 = vmatpush1.msra.mxu0 0.0
    %1300 = vmatprep.subr.mxu0 0.0
    %1301 = vmatpush1.msra.mxu0 0.0
    %1302 = vmatprep.subr.mxu0 0.0
    %1303 = vmatpush1.msra.mxu0 0.0
    %1304 = vmatprep.subr.mxu0 0.0
    %1305 = vmatpush1.msra.mxu0 0.0
    %1306 = vmatprep.subr.mxu0 0.0
    %1307 = vmatpush1.msra.mxu0 0.0
    %1308 = vmatprep.subr.mxu0 0.0
    %1309 = vmatpush1.msra.mxu0 0.0
    %1310 = vmatprep.subr.mxu0 0.0
    %1311 = vmatpush1.msra.mxu0 0.0
    %1312 = vmatprep.subr.mxu0 0.0
    %1313 = vmatpush1.msra.mxu0 0.0
    %1314 = vmatprep.subr.mxu0 0.0
    %1315 = vmatpush1.msra.mxu0 0.0
    %1316 = vmatprep.subr.mxu0 0.0
    %1317 = vmatpush1.msra.mxu0 0.0
    %1318 = vmatprep.subr.mxu0 0.0
    %1319 = vmatpush1.msra.mxu0 0.0
    %1320 = vmatprep.subr.mxu0 0.0
    %1321 = vmatpush1.msra.mxu0 0.0
    %1322 = vmatprep.subr.mxu0 0.0
    %1323 = vmatpush1.msra.mxu0 0.0
    %1324 = vmatprep.subr.mxu0 0.0
    %1325 = vmatpush1.msra.mxu0 0.0
    %1326 = vmatprep.subr.mxu0 0.0
    %1327 = vmatpush1.msra.mxu0 0.0
    %1328 = vmatprep.subr.mxu0 0.0
    %1329 = vmatpush1.msra.mxu0 0.0
    %1330 = vmatprep.subr.mxu0 0.0
    %1331 = vmatpush1.msra.mxu0 0.0
    %1332 = vmatprep.subr.mxu0 0.0
    %1333 = vmatpush1.msra.mxu0 0.0
    %1334 = vmatprep.subr.mxu0 0.0
    %1335 = vmatpush1.msra.mxu0 0.0
    %1336 = vmatprep.mubr.f32.mxu0 0.0
    %1337 = vmatmul.mubr.f32.gmra.mrb[0].mxu0 %v1270
    %v1338 = vpop.f32.mrb[0].mxu0
    %v1339 = vadd.f32 %v236, %v1338
    %v1340 = vpop.f32.mrb[0].mxu0
    %1341 = vdwg.mxu0
    %1343 = vrot.lane.b32.xlu0 %v1168, 32
    %v1344 = vpop.permute.xlu0 %1343
    %v1345 = vsel %vm241, %v1344, 0
    %1347 = vmatprep.subr.mxu0 0.0
    %1348 = vmatpush1.msra.mxu0 %v118
    %1349 = vmatprep.subr.mxu0 0.0
    %1350 = vmatpush1.msra.mxu0 %v119
    %1351 = vmatprep.subr.mxu0 0.0
    %1352 = vmatpush1.msra.mxu0 %v120
    %1353 = vmatprep.subr.mxu0 0.0
    %1354 = vmatpush1.msra.mxu0 %v121
    %1355 = vmatprep.subr.mxu0 0.0
    %1356 = vmatpush1.msra.mxu0 0.0
    %1357 = vmatprep.subr.mxu0 0.0
    %1358 = vmatpush1.msra.mxu0 0.0
    %1359 = vmatprep.subr.mxu0 0.0
    %1360 = vmatpush1.msra.mxu0 0.0
    %1361 = vmatprep.subr.mxu0 0.0
    %1362 = vmatpush1.msra.mxu0 0.0
    %1363 = vmatprep.subr.mxu0 0.0
    %1364 = vmatpush1.msra.mxu0 0.0
    %1365 = vmatprep.subr.mxu0 0.0
    %1366 = vmatpush1.msra.mxu0 0.0
    %1367 = vmatprep.subr.mxu0 0.0
    %1368 = vmatpush1.msra.mxu0 0.0
    %1369 = vmatprep.subr.mxu0 0.0
    %1370 = vmatpush1.msra.mxu0 0.0
    %1371 = vmatprep.subr.mxu0 0.0
    %1372 = vmatpush1.msra.mxu0 0.0
    %1373 = vmatprep.subr.mxu0 0.0
    %1374 = vmatpush1.msra.mxu0 0.0
    %1375 = vmatprep.subr.mxu0 0.0
    %1376 = vmatpush1.msra.mxu0 0.0
    %1377 = vmatprep.subr.mxu0 0.0
    %1378 = vmatpush1.msra.mxu0 0.0
    %1379 = vmatprep.subr.mxu0 0.0
    %1380 = vmatpush1.msra.mxu0 0.0
    %1381 = vmatprep.subr.mxu0 0.0
    %1382 = vmatpush1.msra.mxu0 0.0
    %1383 = vmatprep.subr.mxu0 0.0
    %1384 = vmatpush1.msra.mxu0 0.0
    %1385 = vmatprep.subr.mxu0 0.0
    %1386 = vmatpush1.msra.mxu0 0.0
    %1387 = vmatprep.subr.mxu0 0.0
    %1388 = vmatpush1.msra.mxu0 0.0
    %1389 = vmatprep.subr.mxu0 0.0
    %1390 = vmatpush1.msra.mxu0 0.0
    %1391 = vmatprep.subr.mxu0 0.0
    %1392 = vmatpush1.msra.mxu0 0.0
    %1393 = vmatprep.subr.mxu0 0.0
    %1394 = vmatpush1.msra.mxu0 0.0
    %1395 = vmatprep.subr.mxu0 0.0
    %1396 = vmatpush1.msra.mxu0 0.0
    %1397 = vmatprep.subr.mxu0 0.0
    %1398 = vmatpush1.msra.mxu0 0.0
    %1399 = vmatprep.subr.mxu0 0.0
    %1400 = vmatpush1.msra.mxu0 0.0
    %1401 = vmatprep.subr.mxu0 0.0
    %1402 = vmatpush1.msra.mxu0 0.0
    %1403 = vmatprep.subr.mxu0 0.0
    %1404 = vmatpush1.msra.mxu0 0.0
    %1405 = vmatprep.subr.mxu0 0.0
    %1406 = vmatpush1.msra.mxu0 0.0
    %1407 = vmatprep.subr.mxu0 0.0
    %1408 = vmatpush1.msra.mxu0 0.0
    %1409 = vmatprep.subr.mxu0 0.0
    %1410 = vmatpush1.msra.mxu0 0.0
    %1411 = vmatprep.mubr.f32.mxu0 0.0
    %1412 = vmatmul.mubr.f32.gmra.mrb[0].mxu0 %v1345
    %v1413 = vpop.f32.mrb[0].mxu0
    %v1414 = vadd.f32 0.0, %v1413
    %v1415 = vpop.f32.mrb[0].mxu0
    %1416 = vdwg.mxu0
    %v1417 = vadd.f32 %v1339, %v1414
    %v1418 = vxor.u32 %v1417, 2147483648
    %v1419 = vmul.f32 %v1418, 1.442695
    %v1420 = vpow.pop %v1419
    %v1421 = vadd.f32 %v1420, 1.0
    %v1422 = vrcp.pop %v1421
    %v1423 = vmul.f32 1.0, %v1422
    %v1424 = vtanh.pop %v1417
    %v1425 = vmul.f32 %v1423, %v1162
    %1427 = vrot.lane.b32.xlu0 %v1424, 64
    %v1428 = vpop.permute.xlu0 %1427
    %v1430 = vmul.f32 %v1423, %v1428
    %1432 = vrot.lane.b32.xlu0 %v1430, 32
    %v1433 = vpop.permute.xlu0 %1432
    %v1435 = vadd.f32 %v1425, %v1433
    %v1436 = vtanh.pop %v1435
    %1438 = vrot.lane.b32.xlu0 %v1436, 64
    %v1439 = vpop.permute.xlu0 %1438
    %v1441 = vmul.f32 %v1423, %v1439
    %1442 = vmatprep.subr.mxu0 0.0
    %1443 = vmatpush1.msra.mxu0 %v114
    %1444 = vmatprep.subr.mxu0 0.0
    %1445 = vmatpush1.msra.mxu0 %v115
    %1446 = vmatprep.subr.mxu0 0.0
    %1447 = vmatpush1.msra.mxu0 %v116
    %1448 = vmatprep.subr.mxu0 0.0
    %1449 = vmatpush1.msra.mxu0 %v117
    %1450 = vmatprep.subr.mxu0 0.0
    %1451 = vmatpush1.msra.mxu0 0.0
    %1452 = vmatprep.subr.mxu0 0.0
    %1453 = vmatpush1.msra.mxu0 0.0
    %1454 = vmatprep.subr.mxu0 0.0
    %1455 = vmatpush1.msra.mxu0 0.0
    %1456 = vmatprep.subr.mxu0 0.0
    %1457 = vmatpush1.msra.mxu0 0.0
    %1458 = vmatprep.subr.mxu0 0.0
    %1459 = vmatpush1.msra.mxu0 0.0
    %1460 = vmatprep.subr.mxu0 0.0
    %1461 = vmatpush1.msra.mxu0 0.0
    %1462 = vmatprep.subr.mxu0 0.0
    %1463 = vmatpush1.msra.mxu0 0.0
    %1464 = vmatprep.subr.mxu0 0.0
    %1465 = vmatpush1.msra.mxu0 0.0
    %1466 = vmatprep.subr.mxu0 0.0
    %1467 = vmatpush1.msra.mxu0 0.0
    %1468 = vmatprep.subr.mxu0 0.0
    %1469 = vmatpush1.msra.mxu0 0.0
    %1470 = vmatprep.subr.mxu0 0.0
    %1471 = vmatpush1.msra.mxu0 0.0
    %1472 = vmatprep.subr.mxu0 0.0
    %1473 = vmatpush1.msra.mxu0 0.0
    %1474 = vmatprep.subr.mxu0 0.0
    %1475 = vmatpush1.msra.mxu0 0.0
    %1476 = vmatprep.subr.mxu0 0.0
    %1477 = vmatpush1.msra.mxu0 0.0
    %1478 = vmatprep.subr.mxu0 0.0
    %1479 = vmatpush1.msra.mxu0 0.0
    %1480 = vmatprep.subr.mxu0 0.0
    %1481 = vmatpush1.msra.mxu0 0.0
    %1482 = vmatprep.subr.mxu0 0.0
    %1483 = vmatpush1.msra.mxu0 0.0
    %1484 = vmatprep.subr.mxu0 0.0
    %1485 = vmatpush1.msra.mxu0 0.0
    %1486 = vmatprep.subr.mxu0 0.0
    %1487 = vmatpush1.msra.mxu0 0.0
    %1488 = vmatprep.subr.mxu0 0.0
    %1489 = vmatpush1.msra.mxu0 0.0
    %1490 = vmatprep.subr.mxu0 0.0
    %1491 = vmatpush1.msra.mxu0 0.0
    %1492 = vmatprep.subr.mxu0 0.0
    %1493 = vmatpush1.msra.mxu0 0.0
    %1494 = vmatprep.subr.mxu0 0.0
    %1495 = vmatpush1.msra.mxu0 0.0
    %1496 = vmatprep.subr.mxu0 0.0
    %1497 = vmatpush1.msra.mxu0 0.0
    %1498 = vmatprep.subr.mxu0 0.0
    %1499 = vmatpush1.msra.mxu0 0.0
    %1500 = vmatprep.subr.mxu0 0.0
    %1501 = vmatpush1.msra.mxu0 0.0
    %1502 = vmatprep.subr.mxu0 0.0
    %1503 = vmatpush1.msra.mxu0 0.0
    %1504 = vmatprep.subr.mxu0 0.0
    %1505 = vmatpush1.msra.mxu0 0.0
    %1506 = vmatprep.mubr.f32.mxu0 0.0
    %1507 = vmatmul.mubr.f32.gmra.mrb[0].mxu0 %v1270
    %v1508 = vpop.f32.mrb[0].mxu0
    %v1509 = vadd.f32 0.0, %v1508
    %v1510 = vpop.f32.mrb[0].mxu0
    %1511 = vdwg.mxu0
    %v1513 = vrot.slane %v1509, 6
    %v1515 = vadd.f32 %v211, %v1513
    %v1516 = vxor.u32 %v1515, 2147483648
    %v1517 = vmul.f32 %v1516, 1.442695
    %v1518 = vpow.pop %v1517
    %v1519 = vadd.f32 %v1518, 1.0
    %v1520 = vrcp.pop %v1519
    %v1521 = vmul.f32 1.0, %v1520
    %v1522 = vtanh.pop %v1515
    %v1524 = vrot.slane %v1260, 6
    %v1526 = vmul.f32 %v1521, %v1524
    %1528 = vrot.lane.b32.xlu0 %v1522, 64
    %v1529 = vpop.permute.xlu0 %1528
    %v1531 = vmul.f32 %v1521, %v1529
    %1533 = vrot.lane.b32.xlu0 %v1531, 32
    %v1534 = vpop.permute.xlu0 %1533
    %v1536 = vadd.f32 %v1526, %v1534
    %v1537 = vtanh.pop %v1536
    %1539 = vrot.lane.b32.xlu0 %v1537, 64
    %v1540 = vpop.permute.xlu0 %1539
    %v1542 = vmul.f32 %v1521, %v1540
    %v1544 = vrot.slane %v1542, 2
    %1545 = vrot.lane.b32.xlu0 %v1544, 32
    %v1546 = vpop.permute.xlu0 %1545
    %v1547 = vsel %vm241, %v1546, 0
    %1549 = vmatprep.subr.mxu0 0.0
    %1550 = vmatpush1.msra.mxu0 %v110
    %1551 = vmatprep.subr.mxu0 0.0
    %1552 = vmatpush1.msra.mxu0 %v111
    %1553 = vmatprep.subr.mxu0 0.0
    %1554 = vmatpush1.msra.mxu0 %v112
    %1555 = vmatprep.subr.mxu0 0.0
    %1556 = vmatpush1.msra.mxu0 %v113
    %1557 = vmatprep.subr.mxu0 0.0
    %1558 = vmatpush1.msra.mxu0 0.0
    %1559 = vmatprep.subr.mxu0 0.0
    %1560 = vmatpush1.msra.mxu0 0.0
    %1561 = vmatprep.subr.mxu0 0.0
    %1562 = vmatpush1.msra.mxu0 0.0
    %1563 = vmatprep.subr.mxu0 0.0
    %1564 = vmatpush1.msra.mxu0 0.0
    %1565 = vmatprep.subr.mxu0 0.0
    %1566 = vmatpush1.msra.mxu0 0.0
    %1567 = vmatprep.subr.mxu0 0.0
    %1568 = vmatpush1.msra.mxu0 0.0
    %1569 = vmatprep.subr.mxu0 0.0
    %1570 = vmatpush1.msra.mxu0 0.0
    %1571 = vmatprep.subr.mxu0 0.0
    %1572 = vmatpush1.msra.mxu0 0.0
    %1573 = vmatprep.subr.mxu0 0.0
    %1574 = vmatpush1.msra.mxu0 0.0
    %1575 = vmatprep.subr.mxu0 0.0
    %1576 = vmatpush1.msra.mxu0 0.0
    %1577 = vmatprep.subr.mxu0 0.0
    %1578 = vmatpush1.msra.mxu0 0.0
    %1579 = vmatprep.subr.mxu0 0.0
    %1580 = vmatpush1.msra.mxu0 0.0
    %1581 = vmatprep.subr.mxu0 0.0
    %1582 = vmatpush1.msra.mxu0 0.0
    %1583 = vmatprep.subr.mxu0 0.0
    %1584 = vmatpush1.msra.mxu0 0.0
    %1585 = vmatprep.subr.mxu0 0.0
    %1586 = vmatpush1.msra.mxu0 0.0
    %1587 = vmatprep.subr.mxu0 0.0
    %1588 = vmatpush1.msra.mxu0 0.0
    %1589 = vmatprep.subr.mxu0 0.0
    %1590 = vmatpush1.msra.mxu0 0.0
    %1591 = vmatprep.subr.mxu0 0.0
    %1592 = vmatpush1.msra.mxu0 0.0
    %1593 = vmatprep.subr.mxu0 0.0
    %1594 = vmatpush1.msra.mxu0 0.0
    %1595 = vmatprep.subr.mxu0 0.0
    %1596 = vmatpush1.msra.mxu0 0.0
    %1597 = vmatprep.subr.mxu0 0.0
    %1598 = vmatpush1.msra.mxu0 0.0
    %1599 = vmatprep.subr.mxu0 0.0
    %1600 = vmatpush1.msra.mxu0 0.0
    %1601 = vmatprep.subr.mxu0 0.0
    %1602 = vmatpush1.msra.mxu0 0.0
    %1603 = vmatprep.subr.mxu0 0.0
    %1604 = vmatpush1.msra.mxu0 0.0
    %1605 = vmatprep.subr.mxu0 0.0
    %1606 = vmatpush1.msra.mxu0 0.0
    %1607 = vmatprep.subr.mxu0 0.0
    %1608 = vmatpush1.msra.mxu0 0.0
    %1609 = vmatprep.subr.mxu0 0.0
    %1610 = vmatpush1.msra.mxu0 0.0
    %1611 = vmatprep.subr.mxu0 0.0
    %1612 = vmatpush1.msra.mxu0 0.0
    %1613 = vmatprep.mubr.f32.mxu0 0.0
    %1614 = vmatmul.mubr.f32.gmra.mrb[0].mxu0 %v1547
    %v1615 = vpop.f32.mrb[0].mxu0
    %v1616 = vadd.f32 %v236, %v1615
    %v1617 = vpop.f32.mrb[0].mxu0
    %1618 = vdwg.mxu0
    %1620 = vrot.lane.b32.xlu0 %v1441, 32
    %v1621 = vpop.permute.xlu0 %1620
    %v1622 = vsel %vm241, %v1621, 0
    %1624 = vmatprep.subr.mxu0 0.0
    %1625 = vmatpush1.msra.mxu0 %v118
    %1626 = vmatprep.subr.mxu0 0.0
    %1627 = vmatpush1.msra.mxu0 %v119
    %1628 = vmatprep.subr.mxu0 0.0
    %1629 = vmatpush1.msra.mxu0 %v120
    %1630 = vmatprep.subr.mxu0 0.0
    %1631 = vmatpush1.msra.mxu0 %v121
    %1632 = vmatprep.subr.mxu0 0.0
    %1633 = vmatpush1.msra.mxu0 0.0
    %1634 = vmatprep.subr.mxu0 0.0
    %1635 = vmatpush1.msra.mxu0 0.0
    %1636 = vmatprep.subr.mxu0 0.0
    %1637 = vmatpush1.msra.mxu0 0.0
    %1638 = vmatprep.subr.mxu0 0.0
    %1639 = vmatpush1.msra.mxu0 0.0
    %1640 = vmatprep.subr.mxu0 0.0
    %1641 = vmatpush1.msra.mxu0 0.0
    %1642 = vmatprep.subr.mxu0 0.0
    %1643 = vmatpush1.msra.mxu0 0.0
    %1644 = vmatprep.subr.mxu0 0.0
    %1645 = vmatpush1.msra.mxu0 0.0
    %1646 = vmatprep.subr.mxu0 0.0
    %1647 = vmatpush1.msra.mxu0 0.0
    %1648 = vmatprep.subr.mxu0 0.0
    %1649 = vmatpush1.msra.mxu0 0.0
    %1650 = vmatprep.subr.mxu0 0.0
    %1651 = vmatpush1.msra.mxu0 0.0
    %1652 = vmatprep.subr.mxu0 0.0
    %1653 = vmatpush1.msra.mxu0 0.0
    %1654 = vmatprep.subr.mxu0 0.0
    %1655 = vmatpush1.msra.mxu0 0.0
    %1656 = vmatprep.subr.mxu0 0.0
    %1657 = vmatpush1.msra.mxu0 0.0
    %1658 = vmatprep.subr.mxu0 0.0
    %1659 = vmatpush1.msra.mxu0 0.0
    %1660 = vmatprep.subr.mxu0 0.0
    %1661 = vmatpush1.msra.mxu0 0.0
    %1662 = vmatprep.subr.mxu0 0.0
    %1663 = vmatpush1.msra.mxu0 0.0
    %1664 = vmatprep.subr.mxu0 0.0
    %1665 = vmatpush1.msra.mxu0 0.0
    %1666 = vmatprep.subr.mxu0 0.0
    %1667 = vmatpush1.msra.mxu0 0.0
    %1668 = vmatprep.subr.mxu0 0.0
    %1669 = vmatpush1.msra.mxu0 0.0
    %1670 = vmatprep.subr.mxu0 0.0
    %1671 = vmatpush1.msra.mxu0 0.0
    %1672 = vmatprep.subr.mxu0 0.0
    %1673 = vmatpush1.msra.mxu0 0.0
    %1674 = vmatprep.subr.mxu0 0.0
    %1675 = vmatpush1.msra.mxu0 0.0
    %1676 = vmatprep.subr.mxu0 0.0
    %1677 = vmatpush1.msra.mxu0 0.0
    %1678 = vmatprep.subr.mxu0 0.0
    %1679 = vmatpush1.msra.mxu0 0.0
    %1680 = vmatprep.subr.mxu0 0.0
    %1681 = vmatpush1.msra.mxu0 0.0
    %1682 = vmatprep.subr.mxu0 0.0
    %1683 = vmatpush1.msra.mxu0 0.0
    %1684 = vmatprep.subr.mxu0 0.0
    %1685 = vmatpush1.msra.mxu0 0.0
    %1686 = vmatprep.subr.mxu0 0.0
    %1687 = vmatpush1.msra.mxu0 0.0
    %1688 = vmatprep.mubr.f32.mxu0 0.0
    %1689 = vmatmul.mubr.f32.gmra.mrb[0].mxu0 %v1622
    %v1690 = vpop.f32.mrb[0].mxu0
    %v1691 = vadd.f32 0.0, %v1690
    %v1692 = vpop.f32.mrb[0].mxu0
    %1693 = vdwg.mxu0
    %v1694 = vadd.f32 %v1616, %v1691
    %v1695 = vxor.u32 %v1694, 2147483648
    %v1696 = vmul.f32 %v1695, 1.442695
    %v1697 = vpow.pop %v1696
    %v1698 = vadd.f32 %v1697, 1.0
    %v1699 = vrcp.pop %v1698
    %v1700 = vmul.f32 1.0, %v1699
    %v1701 = vtanh.pop %v1694
    %v1702 = vmul.f32 %v1700, %v1435
    %1704 = vrot.lane.b32.xlu0 %v1701, 64
    %v1705 = vpop.permute.xlu0 %1704
    %v1707 = vmul.f32 %v1700, %v1705
    %1709 = vrot.lane.b32.xlu0 %v1707, 32
    %v1710 = vpop.permute.xlu0 %1709
    %v1712 = vadd.f32 %v1702, %v1710
    %v1713 = vtanh.pop %v1712
    %1715 = vrot.lane.b32.xlu0 %v1713, 64
    %v1716 = vpop.permute.xlu0 %1715
    %v1718 = vmul.f32 %v1700, %v1716
    %1719 = vmatprep.subr.mxu0 0.0
    %1720 = vmatpush1.msra.mxu0 %v114
    %1721 = vmatprep.subr.mxu0 0.0
    %1722 = vmatpush1.msra.mxu0 %v115
    %1723 = vmatprep.subr.mxu0 0.0
    %1724 = vmatpush1.msra.mxu0 %v116
    %1725 = vmatprep.subr.mxu0 0.0
    %1726 = vmatpush1.msra.mxu0 %v117
    %1727 = vmatprep.subr.mxu0 0.0
    %1728 = vmatpush1.msra.mxu0 0.0
    %1729 = vmatprep.subr.mxu0 0.0
    %1730 = vmatpush1.msra.mxu0 0.0
    %1731 = vmatprep.subr.mxu0 0.0
    %1732 = vmatpush1.msra.mxu0 0.0
    %1733 = vmatprep.subr.mxu0 0.0
    %1734 = vmatpush1.msra.mxu0 0.0
    %1735 = vmatprep.subr.mxu0 0.0
    %1736 = vmatpush1.msra.mxu0 0.0
    %1737 = vmatprep.subr.mxu0 0.0
    %1738 = vmatpush1.msra.mxu0 0.0
    %1739 = vmatprep.subr.mxu0 0.0
    %1740 = vmatpush1.msra.mxu0 0.0
    %1741 = vmatprep.subr.mxu0 0.0
    %1742 = vmatpush1.msra.mxu0 0.0
    %1743 = vmatprep.subr.mxu0 0.0
    %1744 = vmatpush1.msra.mxu0 0.0
    %1745 = vmatprep.subr.mxu0 0.0
    %1746 = vmatpush1.msra.mxu0 0.0
    %1747 = vmatprep.subr.mxu0 0.0
    %1748 = vmatpush1.msra.mxu0 0.0
    %1749 = vmatprep.subr.mxu0 0.0
    %1750 = vmatpush1.msra.mxu0 0.0
    %1751 = vmatprep.subr.mxu0 0.0
    %1752 = vmatpush1.msra.mxu0 0.0
    %1753 = vmatprep.subr.mxu0 0.0
    %1754 = vmatpush1.msra.mxu0 0.0
    %1755 = vmatprep.subr.mxu0 0.0
    %1756 = vmatpush1.msra.mxu0 0.0
    %1757 = vmatprep.subr.mxu0 0.0
    %1758 = vmatpush1.msra.mxu0 0.0
    %1759 = vmatprep.subr.mxu0 0.0
    %1760 = vmatpush1.msra.mxu0 0.0
    %1761 = vmatprep.subr.mxu0 0.0
    %1762 = vmatpush1.msra.mxu0 0.0
    %1763 = vmatprep.subr.mxu0 0.0
    %1764 = vmatpush1.msra.mxu0 0.0
    %1765 = vmatprep.subr.mxu0 0.0
    %1766 = vmatpush1.msra.mxu0 0.0
    %1767 = vmatprep.subr.mxu0 0.0
    %1768 = vmatpush1.msra.mxu0 0.0
    %1769 = vmatprep.subr.mxu0 0.0
    %1770 = vmatpush1.msra.mxu0 0.0
    %1771 = vmatprep.subr.mxu0 0.0
    %1772 = vmatpush1.msra.mxu0 0.0
    %1773 = vmatprep.subr.mxu0 0.0
    %1774 = vmatpush1.msra.mxu0 0.0
    %1775 = vmatprep.subr.mxu0 0.0
    %1776 = vmatpush1.msra.mxu0 0.0
    %1777 = vmatprep.subr.mxu0 0.0
    %1778 = vmatpush1.msra.mxu0 0.0
    %1779 = vmatprep.subr.mxu0 0.0
    %1780 = vmatpush1.msra.mxu0 0.0
    %1781 = vmatprep.subr.mxu0 0.0
    %1782 = vmatpush1.msra.mxu0 0.0
    %1783 = vmatprep.mubr.f32.mxu0 0.0
    %1784 = vmatmul.mubr.f32.gmra.mrb[0].mxu0 %v1547
    %v1785 = vpop.f32.mrb[0].mxu0
    %v1786 = vadd.f32 0.0, %v1785
    %v1787 = vpop.f32.mrb[0].mxu0
    %1788 = vdwg.mxu0
    %v1790 = vrot.slane %v1786, 4
    %v1792 = vadd.f32 %v211, %v1790
    %v1793 = vxor.u32 %v1792, 2147483648
    %v1794 = vmul.f32 %v1793, 1.442695
    %v1795 = vpow.pop %v1794
    %v1796 = vadd.f32 %v1795, 1.0
    %v1797 = vrcp.pop %v1796
    %v1798 = vmul.f32 1.0, %v1797
    %v1799 = vtanh.pop %v1792
    %v1801 = vrot.slane %v1536, 6
    %v1803 = vmul.f32 %v1798, %v1801
    %1805 = vrot.lane.b32.xlu0 %v1799, 64
    %v1806 = vpop.permute.xlu0 %1805
    %v1808 = vmul.f32 %v1798, %v1806
    %1810 = vrot.lane.b32.xlu0 %v1808, 32
    %v1811 = vpop.permute.xlu0 %1810
    %v1813 = vadd.f32 %v1803, %v1811
    %v1814 = vtanh.pop %v1813
    %1816 = vrot.lane.b32.xlu0 %v1814, 64
    %v1817 = vpop.permute.xlu0 %1816
    %v1819 = vmul.f32 %v1798, %v1817
    %v1821 = vrot.slane %v1819, 4
    %1822 = vrot.lane.b32.xlu0 %v1821, 32
    %v1823 = vpop.permute.xlu0 %1822
    %v1824 = vsel %vm241, %v1823, 0
    %1826 = vmatprep.subr.mxu0 0.0
    %1827 = vmatpush1.msra.mxu0 %v110
    %1828 = vmatprep.subr.mxu0 0.0
    %1829 = vmatpush1.msra.mxu0 %v111
    %1830 = vmatprep.subr.mxu0 0.0
    %1831 = vmatpush1.msra.mxu0 %v112
    %1832 = vmatprep.subr.mxu0 0.0
    %1833 = vmatpush1.msra.mxu0 %v113
    %1834 = vmatprep.subr.mxu0 0.0
    %1835 = vmatpush1.msra.mxu0 0.0
    %1836 = vmatprep.subr.mxu0 0.0
    %1837 = vmatpush1.msra.mxu0 0.0
    %1838 = vmatprep.subr.mxu0 0.0
    %1839 = vmatpush1.msra.mxu0 0.0
    %1840 = vmatprep.subr.mxu0 0.0
    %1841 = vmatpush1.msra.mxu0 0.0
    %1842 = vmatprep.subr.mxu0 0.0
    %1843 = vmatpush1.msra.mxu0 0.0
    %1844 = vmatprep.subr.mxu0 0.0
    %1845 = vmatpush1.msra.mxu0 0.0
    %1846 = vmatprep.subr.mxu0 0.0
    %1847 = vmatpush1.msra.mxu0 0.0
    %1848 = vmatprep.subr.mxu0 0.0
    %1849 = vmatpush1.msra.mxu0 0.0
    %1850 = vmatprep.subr.mxu0 0.0
    %1851 = vmatpush1.msra.mxu0 0.0
    %1852 = vmatprep.subr.mxu0 0.0
    %1853 = vmatpush1.msra.mxu0 0.0
    %1854 = vmatprep.subr.mxu0 0.0
    %1855 = vmatpush1.msra.mxu0 0.0
    %1856 = vmatprep.subr.mxu0 0.0
    %1857 = vmatpush1.msra.mxu0 0.0
    %1858 = vmatprep.subr.mxu0 0.0
    %1859 = vmatpush1.msra.mxu0 0.0
    %1860 = vmatprep.subr.mxu0 0.0
    %1861 = vmatpush1.msra.mxu0 0.0
    %1862 = vmatprep.subr.mxu0 0.0
    %1863 = vmatpush1.msra.mxu0 0.0
    %1864 = vmatprep.subr.mxu0 0.0
    %1865 = vmatpush1.msra.mxu0 0.0
    %1866 = vmatprep.subr.mxu0 0.0
    %1867 = vmatpush1.msra.mxu0 0.0
    %1868 = vmatprep.subr.mxu0 0.0
    %1869 = vmatpush1.msra.mxu0 0.0
    %1870 = vmatprep.subr.mxu0 0.0
    %1871 = vmatpush1.msra.mxu0 0.0
    %1872 = vmatprep.subr.mxu0 0.0
    %1873 = vmatpush1.msra.mxu0 0.0
    %1874 = vmatprep.subr.mxu0 0.0
    %1875 = vmatpush1.msra.mxu0 0.0
    %1876 = vmatprep.subr.mxu0 0.0
    %1877 = vmatpush1.msra.mxu0 0.0
    %1878 = vmatprep.subr.mxu0 0.0
    %1879 = vmatpush1.msra.mxu0 0.0
    %1880 = vmatprep.subr.mxu0 0.0
    %1881 = vmatpush1.msra.mxu0 0.0
    %1882 = vmatprep.subr.mxu0 0.0
    %1883 = vmatpush1.msra.mxu0 0.0
    %1884 = vmatprep.subr.mxu0 0.0
    %1885 = vmatpush1.msra.mxu0 0.0
    %1886 = vmatprep.subr.mxu0 0.0
    %1887 = vmatpush1.msra.mxu0 0.0
    %1888 = vmatprep.subr.mxu0 0.0
    %1889 = vmatpush1.msra.mxu0 0.0
    %1890 = vmatprep.mubr.f32.mxu0 0.0
    %1891 = vmatmul.mubr.f32.gmra.mrb[0].mxu0 %v1824
    %v1892 = vpop.f32.mrb[0].mxu0
    %v1893 = vadd.f32 %v236, %v1892
    %v1894 = vpop.f32.mrb[0].mxu0
    %1895 = vdwg.mxu0
    %1897 = vrot.lane.b32.xlu0 %v1718, 32
    %v1898 = vpop.permute.xlu0 %1897
    %v1899 = vsel %vm241, %v1898, 0
    %1901 = vmatprep.subr.mxu0 0.0
    %1902 = vmatpush1.msra.mxu0 %v118
    %1903 = vmatprep.subr.mxu0 0.0
    %1904 = vmatpush1.msra.mxu0 %v119
    %1905 = vmatprep.subr.mxu0 0.0
    %1906 = vmatpush1.msra.mxu0 %v120
    %1907 = vmatprep.subr.mxu0 0.0
    %1908 = vmatpush1.msra.mxu0 %v121
    %1909 = vmatprep.subr.mxu0 0.0
    %1910 = vmatpush1.msra.mxu0 0.0
    %1911 = vmatprep.subr.mxu0 0.0
    %1912 = vmatpush1.msra.mxu0 0.0
    %1913 = vmatprep.subr.mxu0 0.0
    %1914 = vmatpush1.msra.mxu0 0.0
    %1915 = vmatprep.subr.mxu0 0.0
    %1916 = vmatpush1.msra.mxu0 0.0
    %1917 = vmatprep.subr.mxu0 0.0
    %1918 = vmatpush1.msra.mxu0 0.0
    %1919 = vmatprep.subr.mxu0 0.0
    %1920 = vmatpush1.msra.mxu0 0.0
    %1921 = vmatprep.subr.mxu0 0.0
    %1922 = vmatpush1.msra.mxu0 0.0
    %1923 = vmatprep.subr.mxu0 0.0
    %1924 = vmatpush1.msra.mxu0 0.0
    %1925 = vmatprep.subr.mxu0 0.0
    %1926 = vmatpush1.msra.mxu0 0.0
    %1927 = vmatprep.subr.mxu0 0.0
    %1928 = vmatpush1.msra.mxu0 0.0
    %1929 = vmatprep.subr.mxu0 0.0
    %1930 = vmatpush1.msra.mxu0 0.0
    %1931 = vmatprep.subr.mxu0 0.0
    %1932 = vmatpush1.msra.mxu0 0.0
    %1933 = vmatprep.subr.mxu0 0.0
    %1934 = vmatpush1.msra.mxu0 0.0
    %1935 = vmatprep.subr.mxu0 0.0
    %1936 = vmatpush1.msra.mxu0 0.0
    %1937 = vmatprep.subr.mxu0 0.0
    %1938 = vmatpush1.msra.mxu0 0.0
    %1939 = vmatprep.subr.mxu0 0.0
    %1940 = vmatpush1.msra.mxu0 0.0
    %1941 = vmatprep.subr.mxu0 0.0
    %1942 = vmatpush1.msra.mxu0 0.0
    %1943 = vmatprep.subr.mxu0 0.0
    %1944 = vmatpush1.msra.mxu0 0.0
    %1945 = vmatprep.subr.mxu0 0.0
    %1946 = vmatpush1.msra.mxu0 0.0
    %1947 = vmatprep.subr.mxu0 0.0
    %1948 = vmatpush1.msra.mxu0 0.0
    %1949 = vmatprep.subr.mxu0 0.0
    %1950 = vmatpush1.msra.mxu0 0.0
    %1951 = vmatprep.subr.mxu0 0.0
    %1952 = vmatpush1.msra.mxu0 0.0
    %1953 = vmatprep.subr.mxu0 0.0
    %1954 = vmatpush1.msra.mxu0 0.0
    %1955 = vmatprep.subr.mxu0 0.0
    %1956 = vmatpush1.msra.mxu0 0.0
    %1957 = vmatprep.subr.mxu0 0.0
    %1958 = vmatpush1.msra.mxu0 0.0
    %1959 = vmatprep.subr.mxu0 0.0
    %1960 = vmatpush1.msra.mxu0 0.0
    %1961 = vmatprep.subr.mxu0 0.0
    %1962 = vmatpush1.msra.mxu0 0.0
    %1963 = vmatprep.subr.mxu0 0.0
    %1964 = vmatpush1.msra.mxu0 0.0
    %1965 = vmatprep.mubr.f32.mxu0 0.0
    %1966 = vmatmul.mubr.f32.gmra.mrb[0].mxu0 %v1899
    %v1967 = vpop.f32.mrb[0].mxu0
    %v1968 = vadd.f32 0.0, %v1967
    %v1969 = vpop.f32.mrb[0].mxu0
    %1970 = vdwg.mxu0
    %v1971 = vadd.f32 %v1893, %v1968
    %v1972 = vxor.u32 %v1971, 2147483648
    %v1973 = vmul.f32 %v1972, 1.442695
    %v1974 = vpow.pop %v1973
    %v1975 = vadd.f32 %v1974, 1.0
    %v1976 = vrcp.pop %v1975
    %v1977 = vmul.f32 1.0, %v1976
    %v1978 = vtanh.pop %v1971
    %v1979 = vmul.f32 %v1977, %v1712
    %1981 = vrot.lane.b32.xlu0 %v1978, 64
    %v1982 = vpop.permute.xlu0 %1981
    %v1984 = vmul.f32 %v1977, %v1982
    %1986 = vrot.lane.b32.xlu0 %v1984, 32
    %v1987 = vpop.permute.xlu0 %1986
    %v1989 = vadd.f32 %v1979, %v1987
    %v1990 = vtanh.pop %v1989
    %1992 = vrot.lane.b32.xlu0 %v1990, 64
    %v1993 = vpop.permute.xlu0 %1992
    %v1995 = vmul.f32 %v1977, %v1993
    %1996 = vmatprep.subr.mxu0 0.0
    %1997 = vmatpush1.msra.mxu0 %v114
    %1998 = vmatprep.subr.mxu0 0.0
    %1999 = vmatpush1.msra.mxu0 %v115
    %2000 = vmatprep.subr.mxu0 0.0
    %2001 = vmatpush1.msra.mxu0 %v116
    %2002 = vmatprep.subr.mxu0 0.0
    %2003 = vmatpush1.msra.mxu0 %v117
    %2004 = vmatprep.subr.mxu0 0.0
    %2005 = vmatpush1.msra.mxu0 0.0
    %2006 = vmatprep.subr.mxu0 0.0
    %2007 = vmatpush1.msra.mxu0 0.0
    %2008 = vmatprep.subr.mxu0 0.0
    %2009 = vmatpush1.msra.mxu0 0.0
    %2010 = vmatprep.subr.mxu0 0.0
    %2011 = vmatpush1.msra.mxu0 0.0
    %2012 = vmatprep.subr.mxu0 0.0
    %2013 = vmatpush1.msra.mxu0 0.0
    %2014 = vmatprep.subr.mxu0 0.0
    %2015 = vmatpush1.msra.mxu0 0.0
    %2016 = vmatprep.subr.mxu0 0.0
    %2017 = vmatpush1.msra.mxu0 0.0
    %2018 = vmatprep.subr.mxu0 0.0
    %2019 = vmatpush1.msra.mxu0 0.0
    %2020 = vmatprep.subr.mxu0 0.0
    %2021 = vmatpush1.msra.mxu0 0.0
    %2022 = vmatprep.subr.mxu0 0.0
    %2023 = vmatpush1.msra.mxu0 0.0
    %2024 = vmatprep.subr.mxu0 0.0
    %2025 = vmatpush1.msra.mxu0 0.0
    %2026 = vmatprep.subr.mxu0 0.0
    %2027 = vmatpush1.msra.mxu0 0.0
    %2028 = vmatprep.subr.mxu0 0.0
    %2029 = vmatpush1.msra.mxu0 0.0
    %2030 = vmatprep.subr.mxu0 0.0
    %2031 = vmatpush1.msra.mxu0 0.0
    %2032 = vmatprep.subr.mxu0 0.0
    %2033 = vmatpush1.msra.mxu0 0.0
    %2034 = vmatprep.subr.mxu0 0.0
    %2035 = vmatpush1.msra.mxu0 0.0
    %2036 = vmatprep.subr.mxu0 0.0
    %2037 = vmatpush1.msra.mxu0 0.0
    %2038 = vmatprep.subr.mxu0 0.0
    %2039 = vmatpush1.msra.mxu0 0.0
    %2040 = vmatprep.subr.mxu0 0.0
    %2041 = vmatpush1.msra.mxu0 0.0
    %2042 = vmatprep.subr.mxu0 0.0
    %2043 = vmatpush1.msra.mxu0 0.0
    %2044 = vmatprep.subr.mxu0 0.0
    %2045 = vmatpush1.msra.mxu0 0.0
    %2046 = vmatprep.subr.mxu0 0.0
    %2047 = vmatpush1.msra.mxu0 0.0
    %2048 = vmatprep.subr.mxu0 0.0
    %2049 = vmatpush1.msra.mxu0 0.0
    %2050 = vmatprep.subr.mxu0 0.0
    %2051 = vmatpush1.msra.mxu0 0.0
    %2052 = vmatprep.subr.mxu0 0.0
    %2053 = vmatpush1.msra.mxu0 0.0
    %2054 = vmatprep.subr.mxu0 0.0
    %2055 = vmatpush1.msra.mxu0 0.0
    %2056 = vmatprep.subr.mxu0 0.0
    %2057 = vmatpush1.msra.mxu0 0.0
    %2058 = vmatprep.subr.mxu0 0.0
    %2059 = vmatpush1.msra.mxu0 0.0
    %2060 = vmatprep.mubr.f32.mxu0 0.0
    %2061 = vmatmul.mubr.f32.gmra.mrb[0].mxu0 %v1824
    %v2062 = vpop.f32.mrb[0].mxu0
    %v2063 = vadd.f32 0.0, %v2062
    %v2064 = vpop.f32.mrb[0].mxu0
    %2065 = vdwg.mxu0
    %v2067 = vrot.slane %v2063, 2
    %v2069 = vadd.f32 %v211, %v2067
    %v2070 = vxor.u32 %v2069, 2147483648
    %v2071 = vmul.f32 %v2070, 1.442695
    %v2072 = vpow.pop %v2071
    %v2073 = vadd.f32 %v2072, 1.0
    %v2074 = vrcp.pop %v2073
    %v2075 = vmul.f32 1.0, %v2074
    %v2076 = vtanh.pop %v2069
    %v2078 = vrot.slane %v1813, 6
    %v2080 = vmul.f32 %v2075, %v2078
    %2082 = vrot.lane.b32.xlu0 %v2076, 64
    %v2083 = vpop.permute.xlu0 %2082
    %v2085 = vmul.f32 %v2075, %v2083
    %2087 = vrot.lane.b32.xlu0 %v2085, 32
    %v2088 = vpop.permute.xlu0 %2087
    %v2090 = vadd.f32 %v2080, %v2088
    %v2091 = vtanh.pop %v2090
    %2093 = vrot.lane.b32.xlu0 %v2091, 64
    %v2094 = vpop.permute.xlu0 %2093
    %v2096 = vmul.f32 %v2075, %v2094
    %v2098 = vrot.slane %v2096, 6
    %2099 = vrot.lane.b32.xlu0 %v2098, 32
    %v2100 = vpop.permute.xlu0 %2099
    %v2101 = vsel %vm241, %v2100, 0
    %2103 = vmatprep.subr.mxu0 0.0
    %2104 = vmatpush1.msra.mxu0 %v110
    %2105 = vmatprep.subr.mxu0 0.0
    %2106 = vmatpush1.msra.mxu0 %v111
    %2107 = vmatprep.subr.mxu0 0.0
    %2108 = vmatpush1.msra.mxu0 %v112
    %2109 = vmatprep.subr.mxu0 0.0
    %2110 = vmatpush1.msra.mxu0 %v113
    %2111 = vmatprep.subr.mxu0 0.0
    %2112 = vmatpush1.msra.mxu0 0.0
    %2113 = vmatprep.subr.mxu0 0.0
    %2114 = vmatpush1.msra.mxu0 0.0
    %2115 = vmatprep.subr.mxu0 0.0
    %2116 = vmatpush1.msra.mxu0 0.0
    %2117 = vmatprep.subr.mxu0 0.0
    %2118 = vmatpush1.msra.mxu0 0.0
    %2119 = vmatprep.subr.mxu0 0.0
    %2120 = vmatpush1.msra.mxu0 0.0
    %2121 = vmatprep.subr.mxu0 0.0
    %2122 = vmatpush1.msra.mxu0 0.0
    %2123 = vmatprep.subr.mxu0 0.0
    %2124 = vmatpush1.msra.mxu0 0.0
    %2125 = vmatprep.subr.mxu0 0.0
    %2126 = vmatpush1.msra.mxu0 0.0
    %2127 = vmatprep.subr.mxu0 0.0
    %2128 = vmatpush1.msra.mxu0 0.0
    %2129 = vmatprep.subr.mxu0 0.0
    %2130 = vmatpush1.msra.mxu0 0.0
    %2131 = vmatprep.subr.mxu0 0.0
    %2132 = vmatpush1.msra.mxu0 0.0
    %2133 = vmatprep.subr.mxu0 0.0
    %2134 = vmatpush1.msra.mxu0 0.0
    %2135 = vmatprep.subr.mxu0 0.0
    %2136 = vmatpush1.msra.mxu0 0.0
    %2137 = vmatprep.subr.mxu0 0.0
    %2138 = vmatpush1.msra.mxu0 0.0
    %2139 = vmatprep.subr.mxu0 0.0
    %2140 = vmatpush1.msra.mxu0 0.0
    %2141 = vmatprep.subr.mxu0 0.0
    %2142 = vmatpush1.msra.mxu0 0.0
    %2143 = vmatprep.subr.mxu0 0.0
    %2144 = vmatpush1.msra.mxu0 0.0
    %2145 = vmatprep.subr.mxu0 0.0
    %2146 = vmatpush1.msra.mxu0 0.0
    %2147 = vmatprep.subr.mxu0 0.0
    %2148 = vmatpush1.msra.mxu0 0.0
    %2149 = vmatprep.subr.mxu0 0.0
    %2150 = vmatpush1.msra.mxu0 0.0
    %2151 = vmatprep.subr.mxu0 0.0
    %2152 = vmatpush1.msra.mxu0 0.0
    %2153 = vmatprep.subr.mxu0 0.0
    %2154 = vmatpush1.msra.mxu0 0.0
    %2155 = vmatprep.subr.mxu0 0.0
    %2156 = vmatpush1.msra.mxu0 0.0
    %2157 = vmatprep.subr.mxu0 0.0
    %2158 = vmatpush1.msra.mxu0 0.0
    %2159 = vmatprep.subr.mxu0 0.0
    %2160 = vmatpush1.msra.mxu0 0.0
    %2161 = vmatprep.subr.mxu0 0.0
    %2162 = vmatpush1.msra.mxu0 0.0
    %2163 = vmatprep.subr.mxu0 0.0
    %2164 = vmatpush1.msra.mxu0 0.0
    %2165 = vmatprep.subr.mxu0 0.0
    %2166 = vmatpush1.msra.mxu0 0.0
    %2167 = vmatprep.mubr.f32.mxu0 0.0
    %2168 = vmatmul.mubr.f32.gmra.mrb[0].mxu0 %v2101
    %v2169 = vpop.f32.mrb[0].mxu0
    %v2170 = vadd.f32 %v236, %v2169
    %v2171 = vpop.f32.mrb[0].mxu0
    %2172 = vdwg.mxu0
    %2174 = vrot.lane.b32.xlu0 %v1995, 32
    %v2175 = vpop.permute.xlu0 %2174
    %v2176 = vsel %vm241, %v2175, 0
    %2178 = vmatprep.subr.mxu0 0.0
    %2179 = vmatpush1.msra.mxu0 %v118
    %2180 = vmatprep.subr.mxu0 0.0
    %2181 = vmatpush1.msra.mxu0 %v119
    %2182 = vmatprep.subr.mxu0 0.0
    %2183 = vmatpush1.msra.mxu0 %v120
    %2184 = vmatprep.subr.mxu0 0.0
    %2185 = vmatpush1.msra.mxu0 %v121
    %2186 = vmatprep.subr.mxu0 0.0
    %2187 = vmatpush1.msra.mxu0 0.0
    %2188 = vmatprep.subr.mxu0 0.0
    %2189 = vmatpush1.msra.mxu0 0.0
    %2190 = vmatprep.subr.mxu0 0.0
    %2191 = vmatpush1.msra.mxu0 0.0
    %2192 = vmatprep.subr.mxu0 0.0
    %2193 = vmatpush1.msra.mxu0 0.0
    %2194 = vmatprep.subr.mxu0 0.0
    %2195 = vmatpush1.msra.mxu0 0.0
    %2196 = vmatprep.subr.mxu0 0.0
    %2197 = vmatpush1.msra.mxu0 0.0
    %2198 = vmatprep.subr.mxu0 0.0
    %2199 = vmatpush1.msra.mxu0 0.0
    %2200 = vmatprep.subr.mxu0 0.0
    %2201 = vmatpush1.msra.mxu0 0.0
    %2202 = vmatprep.subr.mxu0 0.0
    %2203 = vmatpush1.msra.mxu0 0.0
    %2204 = vmatprep.subr.mxu0 0.0
    %2205 = vmatpush1.msra.mxu0 0.0
    %2206 = vmatprep.subr.mxu0 0.0
    %2207 = vmatpush1.msra.mxu0 0.0
    %2208 = vmatprep.subr.mxu0 0.0
    %2209 = vmatpush1.msra.mxu0 0.0
    %2210 = vmatprep.subr.mxu0 0.0
    %2211 = vmatpush1.msra.mxu0 0.0
    %2212 = vmatprep.subr.mxu0 0.0
    %2213 = vmatpush1.msra.mxu0 0.0
    %2214 = vmatprep.subr.mxu0 0.0
    %2215 = vmatpush1.msra.mxu0 0.0
    %2216 = vmatprep.subr.mxu0 0.0
    %2217 = vmatpush1.msra.mxu0 0.0
    %2218 = vmatprep.subr.mxu0 0.0
    %2219 = vmatpush1.msra.mxu0 0.0
    %2220 = vmatprep.subr.mxu0 0.0
    %2221 = vmatpush1.msra.mxu0 0.0
    %2222 = vmatprep.subr.mxu0 0.0
    %2223 = vmatpush1.msra.mxu0 0.0
    %2224 = vmatprep.subr.mxu0 0.0
    %2225 = vmatpush1.msra.mxu0 0.0
    %2226 = vmatprep.subr.mxu0 0.0
    %2227 = vmatpush1.msra.mxu0 0.0
    %2228 = vmatprep.subr.mxu0 0.0
    %2229 = vmatpush1.msra.mxu0 0.0
    %2230 = vmatprep.subr.mxu0 0.0
    %2231 = vmatpush1.msra.mxu0 0.0
    %2232 = vmatprep.subr.mxu0 0.0
    %2233 = vmatpush1.msra.mxu0 0.0
    %2234 = vmatprep.subr.mxu0 0.0
    %2235 = vmatpush1.msra.mxu0 0.0
    %2236 = vmatprep.subr.mxu0 0.0
    %2237 = vmatpush1.msra.mxu0 0.0
    %2238 = vmatprep.subr.mxu0 0.0
    %2239 = vmatpush1.msra.mxu0 0.0
    %2240 = vmatprep.subr.mxu0 0.0
    %2241 = vmatpush1.msra.mxu0 0.0
    %2242 = vmatprep.mubr.f32.mxu0 0.0
    %2243 = vmatmul.mubr.f32.gmra.mrb[0].mxu0 %v2176
    %v2244 = vpop.f32.mrb[0].mxu0
    %v2245 = vadd.f32 0.0, %v2244
    %v2246 = vpop.f32.mrb[0].mxu0
    %2247 = vdwg.mxu0
    %v2248 = vadd.f32 %v2170, %v2245
    %v2249 = vxor.u32 %v2248, 2147483648
    %v2250 = vmul.f32 %v2249, 1.442695
    %v2251 = vpow.pop %v2250
    %v2252 = vadd.f32 %v2251, 1.0
    %v2253 = vrcp.pop %v2252
    %v2254 = vmul.f32 1.0, %v2253
    %v2255 = vtanh.pop %v2248
    %v2256 = vmul.f32 %v2254, %v1989
    %2258 = vrot.lane.b32.xlu0 %v2255, 64
    %v2259 = vpop.permute.xlu0 %2258
    %v2261 = vmul.f32 %v2254, %v2259
    %2263 = vrot.lane.b32.xlu0 %v2261, 32
    %v2264 = vpop.permute.xlu0 %2263
    %v2266 = vadd.f32 %v2256, %v2264
    %v2267 = vtanh.pop %v2266
    %2269 = vrot.lane.b32.xlu0 %v2267, 64
    %v2270 = vpop.permute.xlu0 %2269
    %v2272 = vmul.f32 %v2254, %v2270
    %2274 = vrot.lane.b32.xlu0 %v2272, 32
    %v2275 = vpop.permute.xlu0 %2274
    %vm2277 = vcmask 254976
    %2278 = vst.msk [vmem:[#allocation12] sm:$0x3] %vm2277, %v2275
    %v2279 = vld [vmem:[%s7] sm:$0xff]
    %v2280 = vld [vmem:[%s7 + $0x8] sm:$0xff]
    %v2281 = vld [vmem:[%s7 + $0x10] sm:$0xff]
    %v2282 = vld [vmem:[%s7 + $0x18] sm:$0xff]
    %v2283 = vld [vmem:[#allocation10] sm:$0x1]
    %v2285 = vlaneseq
    %v2286 = vshrl.u32 %v2285, 7
    %v2287 = vsub.s32 0, %v2286
    %v2288 = vrot.slane %v2283, %v2287
    %v2290 = vsel %vm241, %v2275, 0
    %2292 = vmatprep.subr.mxu0 0.0
    %2293 = vmatpush1.msra.mxu0 %v2279
    %2294 = vmatprep.subr.mxu0 0.0
    %2295 = vmatpush1.msra.mxu0 %v2280
    %2296 = vmatprep.subr.mxu0 0.0
    %2297 = vmatpush1.msra.mxu0 %v2281
    %2298 = vmatprep.subr.mxu0 0.0
    %2299 = vmatpush1.msra.mxu0 %v2282
    %2300 = vmatprep.subr.mxu0 0.0
    %2301 = vmatpush1.msra.mxu0 0.0
    %2302 = vmatprep.subr.mxu0 0.0
    %2303 = vmatpush1.msra.mxu0 0.0
    %2304 = vmatprep.subr.mxu0 0.0
    %2305 = vmatpush1.msra.mxu0 0.0
    %2306 = vmatprep.subr.mxu0 0.0
    %2307 = vmatpush1.msra.mxu0 0.0
    %2308 = vmatprep.subr.mxu0 0.0
    %2309 = vmatpush1.msra.mxu0 0.0
    %2310 = vmatprep.subr.mxu0 0.0
    %2311 = vmatpush1.msra.mxu0 0.0
    %2312 = vmatprep.subr.mxu0 0.0
    %2313 = vmatpush1.msra.mxu0 0.0
    %2314 = vmatprep.subr.mxu0 0.0
    %2315 = vmatpush1.msra.mxu0 0.0
    %2316 = vmatprep.subr.mxu0 0.0
    %2317 = vmatpush1.msra.mxu0 0.0
    %2318 = vmatprep.subr.mxu0 0.0
    %2319 = vmatpush1.msra.mxu0 0.0
    %2320 = vmatprep.subr.mxu0 0.0
    %2321 = vmatpush1.msra.mxu0 0.0
    %2322 = vmatprep.subr.mxu0 0.0
    %2323 = vmatpush1.msra.mxu0 0.0
    %2324 = vmatprep.subr.mxu0 0.0
    %2325 = vmatpush1.msra.mxu0 0.0
    %2326 = vmatprep.subr.mxu0 0.0
    %2327 = vmatpush1.msra.mxu0 0.0
    %2328 = vmatprep.subr.mxu0 0.0
    %2329 = vmatpush1.msra.mxu0 0.0
    %2330 = vmatprep.subr.mxu0 0.0
    %2331 = vmatpush1.msra.mxu0 0.0
    %2332 = vmatprep.subr.mxu0 0.0
    %2333 = vmatpush1.msra.mxu0 0.0
    %2334 = vmatprep.subr.mxu0 0.0
    %2335 = vmatpush1.msra.mxu0 0.0
    %2336 = vmatprep.subr.mxu0 0.0
    %2337 = vmatpush1.msra.mxu0 0.0
    %2338 = vmatprep.subr.mxu0 0.0
    %2339 = vmatpush1.msra.mxu0 0.0
    %2340 = vmatprep.subr.mxu0 0.0
    %2341 = vmatpush1.msra.mxu0 0.0
    %2342 = vmatprep.subr.mxu0 0.0
    %2343 = vmatpush1.msra.mxu0 0.0
    %2344 = vmatprep.subr.mxu0 0.0
    %2345 = vmatpush1.msra.mxu0 0.0
    %2346 = vmatprep.subr.mxu0 0.0
    %2347 = vmatpush1.msra.mxu0 0.0
    %2348 = vmatprep.subr.mxu0 0.0
    %2349 = vmatpush1.msra.mxu0 0.0
    %2350 = vmatprep.subr.mxu0 0.0
    %2351 = vmatpush1.msra.mxu0 0.0
    %2352 = vmatprep.subr.mxu0 0.0
    %2353 = vmatpush1.msra.mxu0 0.0
    %2354 = vmatprep.subr.mxu0 0.0
    %2355 = vmatpush1.msra.mxu0 0.0
    %2356 = vmatprep.mubr.f32.mxu0 0.0
    %2357 = vmatmul.mubr.f32.gmra.mrb[0].mxu0 %v2290
    %v2358 = vpop.f32.mrb[0].mxu0
    %v2359 = vadd.f32 %v2288, %v2358
    %v2360 = vpop.f32.mrb[0].mxu0
    %2361 = vdwg.mxu0
    %v2362 = vtanh.pop %v2359
    %v2363 = vld [vmem:[%s9] sm:$0xff]
    %v2364 = vld [vmem:[%s9 + $0x8] sm:$0xff]
    %v2365 = vld [vmem:[%s9 + $0x10] sm:$0xff]
    %v2366 = vld [vmem:[%s9 + $0x18] sm:$0xff]
    %v2367 = vld [vmem:[%s10] sm:$0x1]
    %v2369 = vlaneseq
    %v2370 = vshrl.u32 %v2369, 7
    %v2371 = vsub.s32 0, %v2370
    %v2372 = vrot.slane %v2367, %v2371
    %v2375 = vsel %vm241, %v2362, 0
    %2377 = vmatprep.subr.mxu0 0.0
    %2378 = vmatpush1.msra.mxu0 %v2363
    %2379 = vmatprep.subr.mxu0 0.0
    %2380 = vmatpush1.msra.mxu0 %v2364
    %2381 = vmatprep.subr.mxu0 0.0
    %2382 = vmatpush1.msra.mxu0 %v2365
    %2383 = vmatprep.subr.mxu0 0.0
    %2384 = vmatpush1.msra.mxu0 %v2366
    %2385 = vmatprep.subr.mxu0 0.0
    %2386 = vmatpush1.msra.mxu0 0.0
    %2387 = vmatprep.subr.mxu0 0.0
    %2388 = vmatpush1.msra.mxu0 0.0
    %2389 = vmatprep.subr.mxu0 0.0
    %2390 = vmatpush1.msra.mxu0 0.0
    %2391 = vmatprep.subr.mxu0 0.0
    %2392 = vmatpush1.msra.mxu0 0.0
    %2393 = vmatprep.subr.mxu0 0.0
    %2394 = vmatpush1.msra.mxu0 0.0
    %2395 = vmatprep.subr.mxu0 0.0
    %2396 = vmatpush1.msra.mxu0 0.0
    %2397 = vmatprep.subr.mxu0 0.0
    %2398 = vmatpush1.msra.mxu0 0.0
    %2399 = vmatprep.subr.mxu0 0.0
    %2400 = vmatpush1.msra.mxu0 0.0
    %2401 = vmatprep.subr.mxu0 0.0
    %2402 = vmatpush1.msra.mxu0 0.0
    %2403 = vmatprep.subr.mxu0 0.0
    %2404 = vmatpush1.msra.mxu0 0.0
    %2405 = vmatprep.subr.mxu0 0.0
    %2406 = vmatpush1.msra.mxu0 0.0
    %2407 = vmatprep.subr.mxu0 0.0
    %2408 = vmatpush1.msra.mxu0 0.0
    %2409 = vmatprep.subr.mxu0 0.0
    %2410 = vmatpush1.msra.mxu0 0.0
    %2411 = vmatprep.subr.mxu0 0.0
    %2412 = vmatpush1.msra.mxu0 0.0
    %2413 = vmatprep.subr.mxu0 0.0
    %2414 = vmatpush1.msra.mxu0 0.0
    %2415 = vmatprep.subr.mxu0 0.0
    %2416 = vmatpush1.msra.mxu0 0.0
    %2417 = vmatprep.subr.mxu0 0.0
    %2418 = vmatpush1.msra.mxu0 0.0
    %2419 = vmatprep.subr.mxu0 0.0
    %2420 = vmatpush1.msra.mxu0 0.0
    %2421 = vmatprep.subr.mxu0 0.0
    %2422 = vmatpush1.msra.mxu0 0.0
    %2423 = vmatprep.subr.mxu0 0.0
    %2424 = vmatpush1.msra.mxu0 0.0
    %2425 = vmatprep.subr.mxu0 0.0
    %2426 = vmatpush1.msra.mxu0 0.0
    %2427 = vmatprep.subr.mxu0 0.0
    %2428 = vmatpush1.msra.mxu0 0.0
    %2429 = vmatprep.subr.mxu0 0.0
    %2430 = vmatpush1.msra.mxu0 0.0
    %2431 = vmatprep.subr.mxu0 0.0
    %2432 = vmatpush1.msra.mxu0 0.0
    %2433 = vmatprep.subr.mxu0 0.0
    %2434 = vmatpush1.msra.mxu0 0.0
    %2435 = vmatprep.subr.mxu0 0.0
    %2436 = vmatpush1.msra.mxu0 0.0
    %2437 = vmatprep.subr.mxu0 0.0
    %2438 = vmatpush1.msra.mxu0 0.0
    %2439 = vmatprep.subr.mxu0 0.0
    %2440 = vmatpush1.msra.mxu0 0.0
    %2441 = vmatprep.mubr.f32.mxu0 0.0
    %2442 = vmatmul.mubr.f32.gmra.mrb[0].mxu0 %v2375
    %v2443 = vpop.f32.mrb[0].mxu0
    %v2444 = vadd.f32 %v2372, %v2443
    %v2445 = vpop.f32.mrb[0].mxu0
    %2446 = vdwg.mxu0
    %vm2447 = vcmask 58368
    %2448 = vst.msk [vmem:[#allocation11] sm:$0x3] %vm2447, %v2444
    // Predicated region
    $region66: #{tpu_custom_call.1} parent=1 // pred_check
      _
    $region67: #{tpu_custom_call.1} parent=1 // pred_check_branch
      %2450 = sbr.rel (0) target = $region69
    $region68: #{tpu_custom_call.1} parent=1 // pred_region
      %s2452 = ssub.s32 32, 32
      %2453 = vsyncadd [#allocation4], %s2452
      %s2455 = sshll.u32 [#allocation11], 4
      %s2456 = int_to_ptr.vmem [resolvable:$true] %s2455
      %2458 = dma.vmem_to_hbm [thread:$0]  %s2456, 32, %s11, [#allocation4]
    $region69: #{tpu_custom_call.1} parent=1 // pred_fallthru
      _
    // Predicated region
    $region70: #{tpu_custom_call.1} parent=1 // pred_check
      _
    $region71: #{tpu_custom_call.1} parent=1 // pred_check_branch
      %2460 = sbr.rel (0) target = $region73
    $region72: #{tpu_custom_call.1} parent=1 // pred_region
      %s2462 = ssub.s32 32, 32
      %2463 = vsyncadd [#allocation13], %s2462
      %s2465 = sshll.u32 [#allocation12], 4
      %s2466 = int_to_ptr.vmem [resolvable:$true] %s2465
      %2468 = dma.vmem_to_hbm [thread:$0]  %s2466, 32, %s12, [#allocation13]
    $region73: #{tpu_custom_call.1} parent=1 // pred_fallthru
      _
    // Predicated region
    $region74: #{tpu_custom_call.1} parent=1 // pred_check
      _
    $region75: #{tpu_custom_call.1} parent=1 // pred_check_branch
      %2470 = sbr.rel (0) target = $region77
    $region76: #{tpu_custom_call.1} parent=1 // pred_region
      %2471 = dma.done [#allocation4], 32
    $region77: #{tpu_custom_call.1} parent=1 // pred_fallthru
      _
    // Predicated region
    $region78: #{tpu_custom_call.1} parent=1 // pred_check
      _
    $region79: #{tpu_custom_call.1} parent=1 // pred_check_branch
      %2473 = sbr.rel (0) target = $region81
    $region80: #{tpu_custom_call.1} parent=1 // pred_region
      %2474 = dma.done [#allocation13], 32
    $region81: #{tpu_custom_call.1} parent=1 // pred_fallthru
      _
    %2475 = vsyncpa [#allocation3], 1
    %2476 = vsyncpa [#allocation6], 1
    %2477 = vsyncpa [#allocation9], 1
    %2478 = vsyncpa [#allocation4], 1
    %2479 = vsyncpa [#allocation13], 1

</llo_original>
